<compile_context>
chip_gen: v7x
topology: tpu7x:2x2x1
jax: 0.10.0
libtpu: 0.0.40
codegen_flags: <defaults>
</compile_context>

<pallas_src>
import functools

import jax
import jax.numpy as jnp
from jax import lax
from jax.experimental import pallas as pl
from jax.experimental.pallas import tpu as pltpu  # noqa: F401


def _round_up(n, m):
    return ((n + m - 1) // m) * m


def _full_spec(shape):
    """Whole-array-in-VMEM BlockSpec for a grid-less pallas_call."""
    zeros = (0,) * len(shape)
    return pl.BlockSpec(shape, lambda zeros=zeros: zeros)


# ------------------------------ fused model kernel ------------------------------
def _m03_kernel(*refs, num_layers, seq_len, batch, batch_pad, hidden):
    T, B, Bp, H = seq_len, batch, batch_pad, hidden
    H2 = 2 * H

    idx = 0
    x_ref = refs[idx]; idx += 1                          # (T*Bp, in_sz)
    layer_refs = []
    for _ in range(num_layers):
        layer_refs.append(refs[idx:idx + 4]); idx += 4   # wih(I,3H) whh(H,3H) bgi(1,3H) bhn(1,H)
    w1_ref, b1_ref, w2_ref, b2_ref = refs[idx:idx + 4]; idx += 4
    y_ref, hn_ref = refs[idx], refs[idx + 1]             # (T,128), (L, Bp, H)

    x_all = x_ref[...]                                   # (T*Bp, I), layer-0 input

    hs = []
    for layer, (wih_ref, whh_ref, bgi_ref, bhn_ref) in enumerate(layer_refs):
        # ---- phase 1: fused hoisted input projection, all timesteps, all gates (1 MXU op) ----
        gi_all = (jnp.dot(x_all, wih_ref[...], preferred_element_type=jnp.float32)
                  + bgi_ref[...])                        # (T*Bp, 3H), lives in vregs

        whh = whh_ref[...]                               # (H, 3H) fused recurrent weights
        bhn = bhn_ref[...]                               # (1, H)  n-gate hidden bias (× r)

        # ---- phase 2: serial time recurrence, fully unrolled, 1 fused matmul per step ----
        hs = []
        h = None
        for t in range(T):
            gi = gi_all[t * Bp:(t + 1) * Bp, :]          # (Bp, 3H) static sublane slice
            if t == 0:
                # Peeled first step: h0 == 0 -> the h @ W_hh matmul vanishes.
                rz = jax.nn.sigmoid(gi[:, :H2])          # single sigmoid for r and z
                r, z = rz[:, :H], rz[:, H:]
                n = jnp.tanh(gi[:, H2:] + r * bhn)
                h = (1.0 - z) * n
            else:
                gh = jnp.dot(h, whh, preferred_element_type=jnp.float32)  # (Bp, 3H)
                rz = jax.nn.sigmoid(gi[:, :H2] + gh[:, :H2])              # one EUP push for r,z
                r, z = rz[:, :H], rz[:, H:]
                n = jnp.tanh(gi[:, H2:] + r * (gh[:, H2:] + bhn))
                h = (1.0 - z) * n + z * h
            hs.append(h)

        hn_ref[layer] = h                                # final hidden state, once per layer
        if layer + 1 < num_layers:
            x_all = jnp.concatenate(hs, axis=0)          # (T*Bp, H) next layer's input (vregs)

    # ---- FC head: Flatten(T,B,H) -> Linear -> ReLU -> Linear, one lane-dense matmul ----
    cols = []
    for b in range(B):                                   # only the real batch rows
        cols.append(jnp.concatenate([hs[t][b:b + 1, :] for t in range(T)], axis=0))  # (T, H)
    head = jnp.concatenate(cols, axis=1)                 # (T, B*H): head[t, b*H+h] = seq[t,b,h]
    h1 = jnp.maximum(
        jnp.dot(head, w1_ref[...], preferred_element_type=jnp.float32) + b1_ref[...], 0.0)
    y_ref[...] = (jnp.dot(h1, w2_ref[...], preferred_element_type=jnp.float32)
                  + b2_ref[...])                         # (T, 128) unmasked lane-dense store


# ------------------------------ parameters ------------------------------
def init_m03_params(key, in_sz, out_sz, num_layers, tap):
    """Deterministic parameters in PyTorch layout (nn.GRU / nn.Linear shapes)."""
    params = {"gru": [], "fc": {}}
    H = out_sz
    k = 1.0 / jnp.sqrt(H)
    for layer in range(num_layers):
        layer_in = in_sz if layer == 0 else H
        key, k1, k2, k3, k4 = jax.random.split(key, 5)
        params["gru"].append({
            "w_ih": jax.random.uniform(k1, (3 * H, layer_in), jnp.float32, -k, k),
            "w_hh": jax.random.uniform(k2, (3 * H, H), jnp.float32, -k, k),
            "b_ih": jax.random.uniform(k3, (3 * H,), jnp.float32, -k, k),
            "b_hh": jax.random.uniform(k4, (3 * H,), jnp.float32, -k, k),
        })
    d_in, d_hid = H * tap, (H * tap) // 2
    key, k1, k2, k3, k4 = jax.random.split(key, 5)
    kf1 = 1.0 / jnp.sqrt(d_in)
    kf2 = 1.0 / jnp.sqrt(d_hid)
    params["fc"] = {
        "w1": jax.random.uniform(k1, (d_hid, d_in), jnp.float32, -kf1, kf1),
        "b1": jax.random.uniform(k2, (d_hid,), jnp.float32, -kf1, kf1),
        "w2": jax.random.uniform(k3, (1, d_hid), jnp.float32, -kf2, kf2),
        "b2": jax.random.uniform(k4, (1,), jnp.float32, -kf2, kf2),
    }
    return params


def prepare_m03_params(params, tap):
    """One-time conversion to kernel layout: transpose, gate concatenation, bias folding."""
    H = params["gru"][0]["w_hh"].shape[1]
    kp = {"gru": []}
    for lp in params["gru"]:
        wih = lp["w_ih"].T                                # (I, 3H), lane blocks [r | z | n]
        whh = lp["w_hh"].T                                # (H, 3H)
        bi = lp["b_ih"].reshape(3, H)
        bh = lp["b_hh"].reshape(3, H)
        # r/z biases folded into the hoisted projection; n keeps b_hh separate (× r).
        bgi = jnp.concatenate([bi[0] + bh[0], bi[1] + bh[1], bi[2]])[None, :]   # (1, 3H)
        bhn = bh[2][None, :]                              # (1, H)
        kp["gru"].append({"wih": wih, "whh": whh, "bgi": bgi, "bhn": bhn})
    fc = params["fc"]
    kp["fc_w1"] = fc["w1"].T                              # (B*H, F1) -- matches head layout
    kp["fc_b1"] = fc["b1"][None, :]                       # (1, F1)
    kp["fc_w2"] = jnp.pad(fc["w2"].T, ((0, 0), (0, 127)))          # (F1, 128) lane-padded
    kp["fc_b2"] = jnp.pad(fc["b2"][None, :], ((0, 0), (0, 127)))   # (1, 128)
    return kp


# ------------------------------ forward ------------------------------
def m03_forward(kparams, x):
    """x: (T, B, in_sz) with B == tap.  Returns (y: (T, 1), hn: (num_layers, B, H))."""
    T, B, I = x.shape
    L = len(kparams["gru"])
    H = kparams["gru"][0]["whh"].shape[0]
    Bp = max(8, _round_up(B, 8))                          # pad batch to 8 sublanes

    x_p = jnp.pad(x, ((0, 0), (0, Bp - B), (0, 0)))
    x_flat = x_p.reshape(T * Bp, I)

    inputs = [x_flat]
    for lp in kparams["gru"]:
        inputs += [lp["wih"], lp["whh"], lp["bgi"], lp["bhn"]]
    inputs += [kparams["fc_w1"], kparams["fc_b1"], kparams["fc_w2"], kparams["fc_b2"]]

    kernel = functools.partial(_m03_kernel, num_layers=L, seq_len=T,
                               batch=B, batch_pad=Bp, hidden=H)

    # NOTE(v7x): for multiple independent sequences, add a leading grid axis with
    # dimension_semantics=("parallel",) instead of calling this per sequence.
    y_pad, hn_p = pl.pallas_call(
        kernel,
        out_shape=(jax.ShapeDtypeStruct((T, 128), jnp.float32),
                   jax.ShapeDtypeStruct((L, Bp, H), jnp.float32)),
        in_specs=[_full_spec(a.shape) for a in inputs],
        out_specs=(_full_spec((T, 128)), _full_spec((L, Bp, H))),
    )(*inputs)
    return y_pad[:, :1], hn_p[:, :B, :]


# ------------------------------ pure-JAX reference ------------------------------
def _m03_reference(params, x):
    H = params["gru"][0]["w_hh"].shape[1]
    seq = x
    hs = []
    for lp in params["gru"]:
        w_ih, w_hh, b_ih, b_hh = lp["w_ih"], lp["w_hh"], lp["b_ih"], lp["b_hh"]

        def step(h, x_t, w_ih=w_ih, w_hh=w_hh, b_ih=b_ih, b_hh=b_hh):
            gi = x_t @ w_ih.T + b_ih
            gh = h @ w_hh.T + b_hh
            i_r, i_z, i_n = jnp.split(gi, 3, axis=-1)
            h_r, h_z, h_n = jnp.split(gh, 3, axis=-1)
            r = jax.nn.sigmoid(i_r + h_r)
            z = jax.nn.sigmoid(i_z + h_z)
            n = jnp.tanh(i_n + r * h_n)
            h_new = (1.0 - z) * n + z * h
            return h_new, h_new

        h0 = jnp.zeros((x.shape[1], H), jnp.float32)
        h_last, seq = lax.scan(step, h0, seq)
        hs.append(h_last)
    hn = jnp.stack(hs, 0)
    flat = seq.reshape(x.shape[0], -1)
    fc = params["fc"]
    h1 = jnp.maximum(flat @ fc["w1"].T + fc["b1"], 0.0)
    y = h1 @ fc["w2"].T + fc["b2"]
    return y, hn


if __name__ == "__main__":
    # in_sz=8, out_sz(hidden)=16, hid(num_layers)=2, tap=batch=4, seq=6.
    in_sz, out_sz, num_layers, tap, seq = 8, 16, 2, 4, 6

    key = jax.random.PRNGKey(0)
    key, xkey = jax.random.split(key)
    x = jax.random.normal(xkey, (seq, tap, in_sz), dtype=jnp.float32)

    params = init_m03_params(key, in_sz, out_sz, num_layers, tap)
    kparams = prepare_m03_params(params, tap)     # one-time layout prep (outside jit)

    y, hn = jax.jit(m03_forward)(kparams, x)
    jax.block_until_ready((y, hn))

    assert y.shape == (seq, 1)
    assert hn.shape == (num_layers, tap, out_sz)

    y_ref, hn_ref = _m03_reference(params, x)
    assert jnp.allclose(y, y_ref, atol=1e-4, rtol=1e-4)
    assert jnp.allclose(hn, hn_ref, atol=1e-4, rtol=1e-4)

    print("KERNEL_OK")
</pallas_src>

<mosaic_0001>
module attributes {stable_mosaic.version = 11 : i64} {
  func.func @_m03_kernel(%arg0: memref<48x8xf32, #tpu.memory_space<vmem>>, %arg1: memref<8x48xf32, #tpu.memory_space<vmem>>, %arg2: memref<16x48xf32, #tpu.memory_space<vmem>>, %arg3: memref<1x48xf32, #tpu.memory_space<vmem>>, %arg4: memref<1x16xf32, #tpu.memory_space<vmem>>, %arg5: memref<16x48xf32, #tpu.memory_space<vmem>>, %arg6: memref<16x48xf32, #tpu.memory_space<vmem>>, %arg7: memref<1x48xf32, #tpu.memory_space<vmem>>, %arg8: memref<1x16xf32, #tpu.memory_space<vmem>>, %arg9: memref<64x32xf32, #tpu.memory_space<vmem>>, %arg10: memref<1x32xf32, #tpu.memory_space<vmem>>, %arg11: memref<32x128xf32, #tpu.memory_space<vmem>>, %arg12: memref<1x128xf32, #tpu.memory_space<vmem>>, %arg13: memref<6x128xf32, #tpu.memory_space<vmem>>, %arg14: memref<2x8x16xf32, #tpu.memory_space<vmem>>) attributes {dimension_semantics = [], scalar_prefetch = 0 : i64, scratch_operands = 0 : i64, tpu.core_type = #tpu.core_type<tc>} {
    %c0 = arith.constant 0 : index
    %c0_0 = arith.constant 0 : index
    %0 = vector.load %arg0[%c0, %c0_0] : memref<48x8xf32, #tpu.memory_space<vmem>>, vector<48x8xf32>
    %c0_1 = arith.constant 0 : index
    %c0_2 = arith.constant 0 : index
    %1 = vector.load %arg1[%c0_1, %c0_2] : memref<8x48xf32, #tpu.memory_space<vmem>>, vector<8x48xf32>
    %cst = arith.constant dense<0.000000e+00> : vector<48x48xf32>
    %2 = tpu.matmul %0, %1, %cst {dimension_numbers = #tpu.dot_dimension_numbers<[1], [0], [0], [1], [0, 0, 1, 1], [], []>} : vector<48x8xf32>, vector<8x48xf32>, vector<48x48xf32> -> vector<48x48xf32>
    %c0_3 = arith.constant 0 : index
    %c0_4 = arith.constant 0 : index
    %3 = vector.load %arg3[%c0_3, %c0_4] : memref<1x48xf32, #tpu.memory_space<vmem>>, vector<1x48xf32>
    %4 = vector.broadcast %3 : vector<1x48xf32> to vector<48x48xf32>
    %5 = arith.addf %2, %4 : vector<48x48xf32>
    %c0_5 = arith.constant 0 : index
    %c0_6 = arith.constant 0 : index
    %6 = vector.load %arg2[%c0_5, %c0_6] : memref<16x48xf32, #tpu.memory_space<vmem>>, vector<16x48xf32>
    %c0_7 = arith.constant 0 : index
    %c0_8 = arith.constant 0 : index
    %7 = vector.load %arg4[%c0_7, %c0_8] : memref<1x16xf32, #tpu.memory_space<vmem>>, vector<1x16xf32>
    %8 = vector.extract_strided_slice %5 {offsets = [0, 0], sizes = [8, 48], strides = [1, 1]} : vector<48x48xf32> to vector<8x48xf32>
    %9 = vector.extract_strided_slice %8 {offsets = [0, 0], sizes = [8, 32], strides = [1, 1]} : vector<8x48xf32> to vector<8x32xf32>
    %10 = arith.negf %9 : vector<8x32xf32>
    %11 = math.exp %10 : vector<8x32xf32>
    %cst_9 = arith.constant 1.000000e+00 : f32
    %12 = vector.broadcast %cst_9 : f32 to vector<8x32xf32>
    %13 = arith.addf %12, %11 : vector<8x32xf32>
    %14 = arith.divf %12, %13 : vector<8x32xf32>
    %15 = vector.extract_strided_slice %14 {offsets = [0, 0], sizes = [8, 16], strides = [1, 1]} : vector<8x32xf32> to vector<8x16xf32>
    %16 = vector.extract_strided_slice %14 {offsets = [0, 16], sizes = [8, 16], strides = [1, 1]} : vector<8x32xf32> to vector<8x16xf32>
    %17 = vector.extract_strided_slice %8 {offsets = [0, 32], sizes = [8, 16], strides = [1, 1]} : vector<8x48xf32> to vector<8x16xf32>
    %18 = vector.broadcast %7 : vector<1x16xf32> to vector<8x16xf32>
    %19 = arith.mulf %15, %18 : vector<8x16xf32>
    %20 = arith.addf %17, %19 : vector<8x16xf32>
    %21 = math.tanh %20 : vector<8x16xf32>
    %cst_10 = arith.constant 1.000000e+00 : f32
    %22 = vector.broadcast %cst_10 : f32 to vector<8x16xf32>
    %23 = arith.subf %22, %16 : vector<8x16xf32>
    %24 = arith.mulf %23, %21 : vector<8x16xf32>
    %25 = vector.extract_strided_slice %5 {offsets = [8, 0], sizes = [8, 48], strides = [1, 1]} : vector<48x48xf32> to vector<8x48xf32>
    %cst_11 = arith.constant dense<0.000000e+00> : vector<8x48xf32>
    %26 = tpu.matmul %24, %6, %cst_11 {dimension_numbers = #tpu.dot_dimension_numbers<[1], [0], [0], [1], [0, 0, 1, 1], [], []>} : vector<8x16xf32>, vector<16x48xf32>, vector<8x48xf32> -> vector<8x48xf32>
    %27 = vector.extract_strided_slice %25 {offsets = [0, 0], sizes = [8, 32], strides = [1, 1]} : vector<8x48xf32> to vector<8x32xf32>
    %28 = vector.extract_strided_slice %26 {offsets = [0, 0], sizes = [8, 32], strides = [1, 1]} : vector<8x48xf32> to vector<8x32xf32>
    %29 = arith.addf %27, %28 : vector<8x32xf32>
    %30 = arith.negf %29 : vector<8x32xf32>
    %31 = math.exp %30 : vector<8x32xf32>
    %cst_12 = arith.constant 1.000000e+00 : f32
    %32 = vector.broadcast %cst_12 : f32 to vector<8x32xf32>
    %33 = arith.addf %32, %31 : vector<8x32xf32>
    %34 = arith.divf %32, %33 : vector<8x32xf32>
    %35 = vector.extract_strided_slice %34 {offsets = [0, 0], sizes = [8, 16], strides = [1, 1]} : vector<8x32xf32> to vector<8x16xf32>
    %36 = vector.extract_strided_slice %34 {offsets = [0, 16], sizes = [8, 16], strides = [1, 1]} : vector<8x32xf32> to vector<8x16xf32>
    %37 = vector.extract_strided_slice %25 {offsets = [0, 32], sizes = [8, 16], strides = [1, 1]} : vector<8x48xf32> to vector<8x16xf32>
    %38 = vector.extract_strided_slice %26 {offsets = [0, 32], sizes = [8, 16], strides = [1, 1]} : vector<8x48xf32> to vector<8x16xf32>
    %39 = vector.broadcast %7 : vector<1x16xf32> to vector<8x16xf32>
    %40 = arith.addf %38, %39 : vector<8x16xf32>
    %41 = arith.mulf %35, %40 : vector<8x16xf32>
    %42 = arith.addf %37, %41 : vector<8x16xf32>
    %43 = math.tanh %42 : vector<8x16xf32>
    %cst_13 = arith.constant 1.000000e+00 : f32
    %44 = vector.broadcast %cst_13 : f32 to vector<8x16xf32>
    %45 = arith.subf %44, %36 : vector<8x16xf32>
    %46 = arith.mulf %45, %43 : vector<8x16xf32>
    %47 = arith.mulf %36, %24 : vector<8x16xf32>
    %48 = arith.addf %46, %47 : vector<8x16xf32>
    %49 = vector.extract_strided_slice %5 {offsets = [16, 0], sizes = [8, 48], strides = [1, 1]} : vector<48x48xf32> to vector<8x48xf32>
    %cst_14 = arith.constant dense<0.000000e+00> : vector<8x48xf32>
    %50 = tpu.matmul %48, %6, %cst_14 {dimension_numbers = #tpu.dot_dimension_numbers<[1], [0], [0], [1], [0, 0, 1, 1], [], []>} : vector<8x16xf32>, vector<16x48xf32>, vector<8x48xf32> -> vector<8x48xf32>
    %51 = vector.extract_strided_slice %49 {offsets = [0, 0], sizes = [8, 32], strides = [1, 1]} : vector<8x48xf32> to vector<8x32xf32>
    %52 = vector.extract_strided_slice %50 {offsets = [0, 0], sizes = [8, 32], strides = [1, 1]} : vector<8x48xf32> to vector<8x32xf32>
    %53 = arith.addf %51, %52 : vector<8x32xf32>
    %54 = arith.negf %53 : vector<8x32xf32>
    %55 = math.exp %54 : vector<8x32xf32>
    %cst_15 = arith.constant 1.000000e+00 : f32
    %56 = vector.broadcast %cst_15 : f32 to vector<8x32xf32>
    %57 = arith.addf %56, %55 : vector<8x32xf32>
    %58 = arith.divf %56, %57 : vector<8x32xf32>
    %59 = vector.extract_strided_slice %58 {offsets = [0, 0], sizes = [8, 16], strides = [1, 1]} : vector<8x32xf32> to vector<8x16xf32>
    %60 = vector.extract_strided_slice %58 {offsets = [0, 16], sizes = [8, 16], strides = [1, 1]} : vector<8x32xf32> to vector<8x16xf32>
    %61 = vector.extract_strided_slice %49 {offsets = [0, 32], sizes = [8, 16], strides = [1, 1]} : vector<8x48xf32> to vector<8x16xf32>
    %62 = vector.extract_strided_slice %50 {offsets = [0, 32], sizes = [8, 16], strides = [1, 1]} : vector<8x48xf32> to vector<8x16xf32>
    %63 = vector.broadcast %7 : vector<1x16xf32> to vector<8x16xf32>
    %64 = arith.addf %62, %63 : vector<8x16xf32>
    %65 = arith.mulf %59, %64 : vector<8x16xf32>
    %66 = arith.addf %61, %65 : vector<8x16xf32>
    %67 = math.tanh %66 : vector<8x16xf32>
    %cst_16 = arith.constant 1.000000e+00 : f32
    %68 = vector.broadcast %cst_16 : f32 to vector<8x16xf32>
    %69 = arith.subf %68, %60 : vector<8x16xf32>
    %70 = arith.mulf %69, %67 : vector<8x16xf32>
    %71 = arith.mulf %60, %48 : vector<8x16xf32>
    %72 = arith.addf %70, %71 : vector<8x16xf32>
    %73 = vector.extract_strided_slice %5 {offsets = [24, 0], sizes = [8, 48], strides = [1, 1]} : vector<48x48xf32> to vector<8x48xf32>
    %cst_17 = arith.constant dense<0.000000e+00> : vector<8x48xf32>
    %74 = tpu.matmul %72, %6, %cst_17 {dimension_numbers = #tpu.dot_dimension_numbers<[1], [0], [0], [1], [0, 0, 1, 1], [], []>} : vector<8x16xf32>, vector<16x48xf32>, vector<8x48xf32> -> vector<8x48xf32>
    %75 = vector.extract_strided_slice %73 {offsets = [0, 0], sizes = [8, 32], strides = [1, 1]} : vector<8x48xf32> to vector<8x32xf32>
    %76 = vector.extract_strided_slice %74 {offsets = [0, 0], sizes = [8, 32], strides = [1, 1]} : vector<8x48xf32> to vector<8x32xf32>
    %77 = arith.addf %75, %76 : vector<8x32xf32>
    %78 = arith.negf %77 : vector<8x32xf32>
    %79 = math.exp %78 : vector<8x32xf32>
    %cst_18 = arith.constant 1.000000e+00 : f32
    %80 = vector.broadcast %cst_18 : f32 to vector<8x32xf32>
    %81 = arith.addf %80, %79 : vector<8x32xf32>
    %82 = arith.divf %80, %81 : vector<8x32xf32>
    %83 = vector.extract_strided_slice %82 {offsets = [0, 0], sizes = [8, 16], strides = [1, 1]} : vector<8x32xf32> to vector<8x16xf32>
    %84 = vector.extract_strided_slice %82 {offsets = [0, 16], sizes = [8, 16], strides = [1, 1]} : vector<8x32xf32> to vector<8x16xf32>
    %85 = vector.extract_strided_slice %73 {offsets = [0, 32], sizes = [8, 16], strides = [1, 1]} : vector<8x48xf32> to vector<8x16xf32>
    %86 = vector.extract_strided_slice %74 {offsets = [0, 32], sizes = [8, 16], strides = [1, 1]} : vector<8x48xf32> to vector<8x16xf32>
    %87 = vector.broadcast %7 : vector<1x16xf32> to vector<8x16xf32>
    %88 = arith.addf %86, %87 : vector<8x16xf32>
    %89 = arith.mulf %83, %88 : vector<8x16xf32>
    %90 = arith.addf %85, %89 : vector<8x16xf32>
    %91 = math.tanh %90 : vector<8x16xf32>
    %cst_19 = arith.constant 1.000000e+00 : f32
    %92 = vector.broadcast %cst_19 : f32 to vector<8x16xf32>
    %93 = arith.subf %92, %84 : vector<8x16xf32>
    %94 = arith.mulf %93, %91 : vector<8x16xf32>
    %95 = arith.mulf %84, %72 : vector<8x16xf32>
    %96 = arith.addf %94, %95 : vector<8x16xf32>
    %97 = vector.extract_strided_slice %5 {offsets = [32, 0], sizes = [8, 48], strides = [1, 1]} : vector<48x48xf32> to vector<8x48xf32>
    %cst_20 = arith.constant dense<0.000000e+00> : vector<8x48xf32>
    %98 = tpu.matmul %96, %6, %cst_20 {dimension_numbers = #tpu.dot_dimension_numbers<[1], [0], [0], [1], [0, 0, 1, 1], [], []>} : vector<8x16xf32>, vector<16x48xf32>, vector<8x48xf32> -> vector<8x48xf32>
    %99 = vector.extract_strided_slice %97 {offsets = [0, 0], sizes = [8, 32], strides = [1, 1]} : vector<8x48xf32> to vector<8x32xf32>
    %100 = vector.extract_strided_slice %98 {offsets = [0, 0], sizes = [8, 32], strides = [1, 1]} : vector<8x48xf32> to vector<8x32xf32>
    %101 = arith.addf %99, %100 : vector<8x32xf32>
    %102 = arith.negf %101 : vector<8x32xf32>
    %103 = math.exp %102 : vector<8x32xf32>
    %cst_21 = arith.constant 1.000000e+00 : f32
    %104 = vector.broadcast %cst_21 : f32 to vector<8x32xf32>
    %105 = arith.addf %104, %103 : vector<8x32xf32>
    %106 = arith.divf %104, %105 : vector<8x32xf32>
    %107 = vector.extract_strided_slice %106 {offsets = [0, 0], sizes = [8, 16], strides = [1, 1]} : vector<8x32xf32> to vector<8x16xf32>
    %108 = vector.extract_strided_slice %106 {offsets = [0, 16], sizes = [8, 16], strides = [1, 1]} : vector<8x32xf32> to vector<8x16xf32>
    %109 = vector.extract_strided_slice %97 {offsets = [0, 32], sizes = [8, 16], strides = [1, 1]} : vector<8x48xf32> to vector<8x16xf32>
    %110 = vector.extract_strided_slice %98 {offsets = [0, 32], sizes = [8, 16], strides = [1, 1]} : vector<8x48xf32> to vector<8x16xf32>
    %111 = vector.broadcast %7 : vector<1x16xf32> to vector<8x16xf32>
    %112 = arith.addf %110, %111 : vector<8x16xf32>
    %113 = arith.mulf %107, %112 : vector<8x16xf32>
    %114 = arith.addf %109, %113 : vector<8x16xf32>
    %115 = math.tanh %114 : vector<8x16xf32>
    %cst_22 = arith.constant 1.000000e+00 : f32
    %116 = vector.broadcast %cst_22 : f32 to vector<8x16xf32>
    %117 = arith.subf %116, %108 : vector<8x16xf32>
    %118 = arith.mulf %117, %115 : vector<8x16xf32>
    %119 = arith.mulf %108, %96 : vector<8x16xf32>
    %120 = arith.addf %118, %119 : vector<8x16xf32>
    %121 = vector.extract_strided_slice %5 {offsets = [40, 0], sizes = [8, 48], strides = [1, 1]} : vector<48x48xf32> to vector<8x48xf32>
    %cst_23 = arith.constant dense<0.000000e+00> : vector<8x48xf32>
    %122 = tpu.matmul %120, %6, %cst_23 {dimension_numbers = #tpu.dot_dimension_numbers<[1], [0], [0], [1], [0, 0, 1, 1], [], []>} : vector<8x16xf32>, vector<16x48xf32>, vector<8x48xf32> -> vector<8x48xf32>
    %123 = vector.extract_strided_slice %121 {offsets = [0, 0], sizes = [8, 32], strides = [1, 1]} : vector<8x48xf32> to vector<8x32xf32>
    %124 = vector.extract_strided_slice %122 {offsets = [0, 0], sizes = [8, 32], strides = [1, 1]} : vector<8x48xf32> to vector<8x32xf32>
    %125 = arith.addf %123, %124 : vector<8x32xf32>
    %126 = arith.negf %125 : vector<8x32xf32>
    %127 = math.exp %126 : vector<8x32xf32>
    %cst_24 = arith.constant 1.000000e+00 : f32
    %128 = vector.broadcast %cst_24 : f32 to vector<8x32xf32>
    %129 = arith.addf %128, %127 : vector<8x32xf32>
    %130 = arith.divf %128, %129 : vector<8x32xf32>
    %131 = vector.extract_strided_slice %130 {offsets = [0, 0], sizes = [8, 16], strides = [1, 1]} : vector<8x32xf32> to vector<8x16xf32>
    %132 = vector.extract_strided_slice %130 {offsets = [0, 16], sizes = [8, 16], strides = [1, 1]} : vector<8x32xf32> to vector<8x16xf32>
    %133 = vector.extract_strided_slice %121 {offsets = [0, 32], sizes = [8, 16], strides = [1, 1]} : vector<8x48xf32> to vector<8x16xf32>
    %134 = vector.extract_strided_slice %122 {offsets = [0, 32], sizes = [8, 16], strides = [1, 1]} : vector<8x48xf32> to vector<8x16xf32>
    %135 = vector.broadcast %7 : vector<1x16xf32> to vector<8x16xf32>
    %136 = arith.addf %134, %135 : vector<8x16xf32>
    %137 = arith.mulf %131, %136 : vector<8x16xf32>
    %138 = arith.addf %133, %137 : vector<8x16xf32>
    %139 = math.tanh %138 : vector<8x16xf32>
    %cst_25 = arith.constant 1.000000e+00 : f32
    %140 = vector.broadcast %cst_25 : f32 to vector<8x16xf32>
    %141 = arith.subf %140, %132 : vector<8x16xf32>
    %142 = arith.mulf %141, %139 : vector<8x16xf32>
    %143 = arith.mulf %132, %120 : vector<8x16xf32>
    %144 = arith.addf %142, %143 : vector<8x16xf32>
    %c0_26 = arith.constant 0 : index
    %c0_27 = arith.constant 0 : index
    %c0_28 = arith.constant 0 : index
    %145 = vector.load %arg14[%c0_26, %c0_27, %c0_28] : memref<2x8x16xf32, #tpu.memory_space<vmem>>, vector<1x8x16xf32>
    %146 = vector.shape_cast %145 : vector<1x8x16xf32> to vector<8x16xf32>
    %147 = vector.shape_cast %144 : vector<8x16xf32> to vector<1x8x16xf32>
    tpu.vector_store %arg14[%c0_26, %c0_27, %c0_28], %147 {strides = array<i32>} : memref<2x8x16xf32, #tpu.memory_space<vmem>>, vector<1x8x16xf32>,
    %148 = tpu.concatenate %24, %48, %72, %96, %120, %144 in 0 : vector<8x16xf32>, vector<8x16xf32>, vector<8x16xf32>, vector<8x16xf32>, vector<8x16xf32>, vector<8x16xf32> -> vector<48x16xf32>
    %c0_29 = arith.constant 0 : index
    %c0_30 = arith.constant 0 : index
    %149 = vector.load %arg5[%c0_29, %c0_30] : memref<16x48xf32, #tpu.memory_space<vmem>>, vector<16x48xf32>
    %cst_31 = arith.constant dense<0.000000e+00> : vector<48x48xf32>
    %150 = tpu.matmul %148, %149, %cst_31 {dimension_numbers = #tpu.dot_dimension_numbers<[1], [0], [0], [1], [0, 0, 1, 1], [], []>} : vector<48x16xf32>, vector<16x48xf32>, vector<48x48xf32> -> vector<48x48xf32>
    %c0_32 = arith.constant 0 : index
    %c0_33 = arith.constant 0 : index
    %151 = vector.load %arg7[%c0_32, %c0_33] : memref<1x48xf32, #tpu.memory_space<vmem>>, vector<1x48xf32>
    %152 = vector.broadcast %151 : vector<1x48xf32> to vector<48x48xf32>
    %153 = arith.addf %150, %152 : vector<48x48xf32>
    %c0_34 = arith.constant 0 : index
    %c0_35 = arith.constant 0 : index
    %154 = vector.load %arg6[%c0_34, %c0_35] : memref<16x48xf32, #tpu.memory_space<vmem>>, vector<16x48xf32>
    %c0_36 = arith.constant 0 : index
    %c0_37 = arith.constant 0 : index
    %155 = vector.load %arg8[%c0_36, %c0_37] : memref<1x16xf32, #tpu.memory_space<vmem>>, vector<1x16xf32>
    %156 = vector.extract_strided_slice %153 {offsets = [0, 0], sizes = [8, 48], strides = [1, 1]} : vector<48x48xf32> to vector<8x48xf32>
    %157 = vector.extract_strided_slice %156 {offsets = [0, 0], sizes = [8, 32], strides = [1, 1]} : vector<8x48xf32> to vector<8x32xf32>
    %158 = arith.negf %157 : vector<8x32xf32>
    %159 = math.exp %158 : vector<8x32xf32>
    %cst_38 = arith.constant 1.000000e+00 : f32
    %160 = vector.broadcast %cst_38 : f32 to vector<8x32xf32>
    %161 = arith.addf %160, %159 : vector<8x32xf32>
    %162 = arith.divf %160, %161 : vector<8x32xf32>
    %163 = vector.extract_strided_slice %162 {offsets = [0, 0], sizes = [8, 16], strides = [1, 1]} : vector<8x32xf32> to vector<8x16xf32>
    %164 = vector.extract_strided_slice %162 {offsets = [0, 16], sizes = [8, 16], strides = [1, 1]} : vector<8x32xf32> to vector<8x16xf32>
    %165 = vector.extract_strided_slice %156 {offsets = [0, 32], sizes = [8, 16], strides = [1, 1]} : vector<8x48xf32> to vector<8x16xf32>
    %166 = vector.broadcast %155 : vector<1x16xf32> to vector<8x16xf32>
    %167 = arith.mulf %163, %166 : vector<8x16xf32>
    %168 = arith.addf %165, %167 : vector<8x16xf32>
    %169 = math.tanh %168 : vector<8x16xf32>
    %cst_39 = arith.constant 1.000000e+00 : f32
    %170 = vector.broadcast %cst_39 : f32 to vector<8x16xf32>
    %171 = arith.subf %170, %164 : vector<8x16xf32>
    %172 = arith.mulf %171, %169 : vector<8x16xf32>
    %173 = vector.extract_strided_slice %153 {offsets = [8, 0], sizes = [8, 48], strides = [1, 1]} : vector<48x48xf32> to vector<8x48xf32>
    %cst_40 = arith.constant dense<0.000000e+00> : vector<8x48xf32>
    %174 = tpu.matmul %172, %154, %cst_40 {dimension_numbers = #tpu.dot_dimension_numbers<[1], [0], [0], [1], [0, 0, 1, 1], [], []>} : vector<8x16xf32>, vector<16x48xf32>, vector<8x48xf32> -> vector<8x48xf32>
    %175 = vector.extract_strided_slice %173 {offsets = [0, 0], sizes = [8, 32], strides = [1, 1]} : vector<8x48xf32> to vector<8x32xf32>
    %176 = vector.extract_strided_slice %174 {offsets = [0, 0], sizes = [8, 32], strides = [1, 1]} : vector<8x48xf32> to vector<8x32xf32>
    %177 = arith.addf %175, %176 : vector<8x32xf32>
    %178 = arith.negf %177 : vector<8x32xf32>
    %179 = math.exp %178 : vector<8x32xf32>
    %cst_41 = arith.constant 1.000000e+00 : f32
    %180 = vector.broadcast %cst_41 : f32 to vector<8x32xf32>
    %181 = arith.addf %180, %179 : vector<8x32xf32>
    %182 = arith.divf %180, %181 : vector<8x32xf32>
    %183 = vector.extract_strided_slice %182 {offsets = [0, 0], sizes = [8, 16], strides = [1, 1]} : vector<8x32xf32> to vector<8x16xf32>
    %184 = vector.extract_strided_slice %182 {offsets = [0, 16], sizes = [8, 16], strides = [1, 1]} : vector<8x32xf32> to vector<8x16xf32>
    %185 = vector.extract_strided_slice %173 {offsets = [0, 32], sizes = [8, 16], strides = [1, 1]} : vector<8x48xf32> to vector<8x16xf32>
    %186 = vector.extract_strided_slice %174 {offsets = [0, 32], sizes = [8, 16], strides = [1, 1]} : vector<8x48xf32> to vector<8x16xf32>
    %187 = vector.broadcast %155 : vector<1x16xf32> to vector<8x16xf32>
    %188 = arith.addf %186, %187 : vector<8x16xf32>
    %189 = arith.mulf %183, %188 : vector<8x16xf32>
    %190 = arith.addf %185, %189 : vector<8x16xf32>
    %191 = math.tanh %190 : vector<8x16xf32>
    %cst_42 = arith.constant 1.000000e+00 : f32
    %192 = vector.broadcast %cst_42 : f32 to vector<8x16xf32>
    %193 = arith.subf %192, %184 : vector<8x16xf32>
    %194 = arith.mulf %193, %191 : vector<8x16xf32>
    %195 = arith.mulf %184, %172 : vector<8x16xf32>
    %196 = arith.addf %194, %195 : vector<8x16xf32>
    %197 = vector.extract_strided_slice %153 {offsets = [16, 0], sizes = [8, 48], strides = [1, 1]} : vector<48x48xf32> to vector<8x48xf32>
    %cst_43 = arith.constant dense<0.000000e+00> : vector<8x48xf32>
    %198 = tpu.matmul %196, %154, %cst_43 {dimension_numbers = #tpu.dot_dimension_numbers<[1], [0], [0], [1], [0, 0, 1, 1], [], []>} : vector<8x16xf32>, vector<16x48xf32>, vector<8x48xf32> -> vector<8x48xf32>
    %199 = vector.extract_strided_slice %197 {offsets = [0, 0], sizes = [8, 32], strides = [1, 1]} : vector<8x48xf32> to vector<8x32xf32>
    %200 = vector.extract_strided_slice %198 {offsets = [0, 0], sizes = [8, 32], strides = [1, 1]} : vector<8x48xf32> to vector<8x32xf32>
    %201 = arith.addf %199, %200 : vector<8x32xf32>
    %202 = arith.negf %201 : vector<8x32xf32>
    %203 = math.exp %202 : vector<8x32xf32>
    %cst_44 = arith.constant 1.000000e+00 : f32
    %204 = vector.broadcast %cst_44 : f32 to vector<8x32xf32>
    %205 = arith.addf %204, %203 : vector<8x32xf32>
    %206 = arith.divf %204, %205 : vector<8x32xf32>
    %207 = vector.extract_strided_slice %206 {offsets = [0, 0], sizes = [8, 16], strides = [1, 1]} : vector<8x32xf32> to vector<8x16xf32>
    %208 = vector.extract_strided_slice %206 {offsets = [0, 16], sizes = [8, 16], strides = [1, 1]} : vector<8x32xf32> to vector<8x16xf32>
    %209 = vector.extract_strided_slice %197 {offsets = [0, 32], sizes = [8, 16], strides = [1, 1]} : vector<8x48xf32> to vector<8x16xf32>
    %210 = vector.extract_strided_slice %198 {offsets = [0, 32], sizes = [8, 16], strides = [1, 1]} : vector<8x48xf32> to vector<8x16xf32>
    %211 = vector.broadcast %155 : vector<1x16xf32> to vector<8x16xf32>
    %212 = arith.addf %210, %211 : vector<8x16xf32>
    %213 = arith.mulf %207, %212 : vector<8x16xf32>
    %214 = arith.addf %209, %213 : vector<8x16xf32>
    %215 = math.tanh %214 : vector<8x16xf32>
    %cst_45 = arith.constant 1.000000e+00 : f32
    %216 = vector.broadcast %cst_45 : f32 to vector<8x16xf32>
    %217 = arith.subf %216, %208 : vector<8x16xf32>
    %218 = arith.mulf %217, %215 : vector<8x16xf32>
    %219 = arith.mulf %208, %196 : vector<8x16xf32>
    %220 = arith.addf %218, %219 : vector<8x16xf32>
    %221 = vector.extract_strided_slice %153 {offsets = [24, 0], sizes = [8, 48], strides = [1, 1]} : vector<48x48xf32> to vector<8x48xf32>
    %cst_46 = arith.constant dense<0.000000e+00> : vector<8x48xf32>
    %222 = tpu.matmul %220, %154, %cst_46 {dimension_numbers = #tpu.dot_dimension_numbers<[1], [0], [0], [1], [0, 0, 1, 1], [], []>} : vector<8x16xf32>, vector<16x48xf32>, vector<8x48xf32> -> vector<8x48xf32>
    %223 = vector.extract_strided_slice %221 {offsets = [0, 0], sizes = [8, 32], strides = [1, 1]} : vector<8x48xf32> to vector<8x32xf32>
    %224 = vector.extract_strided_slice %222 {offsets = [0, 0], sizes = [8, 32], strides = [1, 1]} : vector<8x48xf32> to vector<8x32xf32>
    %225 = arith.addf %223, %224 : vector<8x32xf32>
    %226 = arith.negf %225 : vector<8x32xf32>
    %227 = math.exp %226 : vector<8x32xf32>
    %cst_47 = arith.constant 1.000000e+00 : f32
    %228 = vector.broadcast %cst_47 : f32 to vector<8x32xf32>
    %229 = arith.addf %228, %227 : vector<8x32xf32>
    %230 = arith.divf %228, %229 : vector<8x32xf32>
    %231 = vector.extract_strided_slice %230 {offsets = [0, 0], sizes = [8, 16], strides = [1, 1]} : vector<8x32xf32> to vector<8x16xf32>
    %232 = vector.extract_strided_slice %230 {offsets = [0, 16], sizes = [8, 16], strides = [1, 1]} : vector<8x32xf32> to vector<8x16xf32>
    %233 = vector.extract_strided_slice %221 {offsets = [0, 32], sizes = [8, 16], strides = [1, 1]} : vector<8x48xf32> to vector<8x16xf32>
    %234 = vector.extract_strided_slice %222 {offsets = [0, 32], sizes = [8, 16], strides = [1, 1]} : vector<8x48xf32> to vector<8x16xf32>
    %235 = vector.broadcast %155 : vector<1x16xf32> to vector<8x16xf32>
    %236 = arith.addf %234, %235 : vector<8x16xf32>
    %237 = arith.mulf %231, %236 : vector<8x16xf32>
    %238 = arith.addf %233, %237 : vector<8x16xf32>
    %239 = math.tanh %238 : vector<8x16xf32>
    %cst_48 = arith.constant 1.000000e+00 : f32
    %240 = vector.broadcast %cst_48 : f32 to vector<8x16xf32>
    %241 = arith.subf %240, %232 : vector<8x16xf32>
    %242 = arith.mulf %241, %239 : vector<8x16xf32>
    %243 = arith.mulf %232, %220 : vector<8x16xf32>
    %244 = arith.addf %242, %243 : vector<8x16xf32>
    %245 = vector.extract_strided_slice %153 {offsets = [32, 0], sizes = [8, 48], strides = [1, 1]} : vector<48x48xf32> to vector<8x48xf32>
    %cst_49 = arith.constant dense<0.000000e+00> : vector<8x48xf32>
    %246 = tpu.matmul %244, %154, %cst_49 {dimension_numbers = #tpu.dot_dimension_numbers<[1], [0], [0], [1], [0, 0, 1, 1], [], []>} : vector<8x16xf32>, vector<16x48xf32>, vector<8x48xf32> -> vector<8x48xf32>
    %247 = vector.extract_strided_slice %245 {offsets = [0, 0], sizes = [8, 32], strides = [1, 1]} : vector<8x48xf32> to vector<8x32xf32>
    %248 = vector.extract_strided_slice %246 {offsets = [0, 0], sizes = [8, 32], strides = [1, 1]} : vector<8x48xf32> to vector<8x32xf32>
    %249 = arith.addf %247, %248 : vector<8x32xf32>
    %250 = arith.negf %249 : vector<8x32xf32>
    %251 = math.exp %250 : vector<8x32xf32>
    %cst_50 = arith.constant 1.000000e+00 : f32
    %252 = vector.broadcast %cst_50 : f32 to vector<8x32xf32>
    %253 = arith.addf %252, %251 : vector<8x32xf32>
    %254 = arith.divf %252, %253 : vector<8x32xf32>
    %255 = vector.extract_strided_slice %254 {offsets = [0, 0], sizes = [8, 16], strides = [1, 1]} : vector<8x32xf32> to vector<8x16xf32>
    %256 = vector.extract_strided_slice %254 {offsets = [0, 16], sizes = [8, 16], strides = [1, 1]} : vector<8x32xf32> to vector<8x16xf32>
    %257 = vector.extract_strided_slice %245 {offsets = [0, 32], sizes = [8, 16], strides = [1, 1]} : vector<8x48xf32> to vector<8x16xf32>
    %258 = vector.extract_strided_slice %246 {offsets = [0, 32], sizes = [8, 16], strides = [1, 1]} : vector<8x48xf32> to vector<8x16xf32>
    %259 = vector.broadcast %155 : vector<1x16xf32> to vector<8x16xf32>
    %260 = arith.addf %258, %259 : vector<8x16xf32>
    %261 = arith.mulf %255, %260 : vector<8x16xf32>
    %262 = arith.addf %257, %261 : vector<8x16xf32>
    %263 = math.tanh %262 : vector<8x16xf32>
    %cst_51 = arith.constant 1.000000e+00 : f32
    %264 = vector.broadcast %cst_51 : f32 to vector<8x16xf32>
    %265 = arith.subf %264, %256 : vector<8x16xf32>
    %266 = arith.mulf %265, %263 : vector<8x16xf32>
    %267 = arith.mulf %256, %244 : vector<8x16xf32>
    %268 = arith.addf %266, %267 : vector<8x16xf32>
    %269 = vector.extract_strided_slice %153 {offsets = [40, 0], sizes = [8, 48], strides = [1, 1]} : vector<48x48xf32> to vector<8x48xf32>
    %cst_52 = arith.constant dense<0.000000e+00> : vector<8x48xf32>
    %270 = tpu.matmul %268, %154, %cst_52 {dimension_numbers = #tpu.dot_dimension_numbers<[1], [0], [0], [1], [0, 0, 1, 1], [], []>} : vector<8x16xf32>, vector<16x48xf32>, vector<8x48xf32> -> vector<8x48xf32>
    %271 = vector.extract_strided_slice %269 {offsets = [0, 0], sizes = [8, 32], strides = [1, 1]} : vector<8x48xf32> to vector<8x32xf32>
    %272 = vector.extract_strided_slice %270 {offsets = [0, 0], sizes = [8, 32], strides = [1, 1]} : vector<8x48xf32> to vector<8x32xf32>
    %273 = arith.addf %271, %272 : vector<8x32xf32>
    %274 = arith.negf %273 : vector<8x32xf32>
    %275 = math.exp %274 : vector<8x32xf32>
    %cst_53 = arith.constant 1.000000e+00 : f32
    %276 = vector.broadcast %cst_53 : f32 to vector<8x32xf32>
    %277 = arith.addf %276, %275 : vector<8x32xf32>
    %278 = arith.divf %276, %277 : vector<8x32xf32>
    %279 = vector.extract_strided_slice %278 {offsets = [0, 0], sizes = [8, 16], strides = [1, 1]} : vector<8x32xf32> to vector<8x16xf32>
    %280 = vector.extract_strided_slice %278 {offsets = [0, 16], sizes = [8, 16], strides = [1, 1]} : vector<8x32xf32> to vector<8x16xf32>
    %281 = vector.extract_strided_slice %269 {offsets = [0, 32], sizes = [8, 16], strides = [1, 1]} : vector<8x48xf32> to vector<8x16xf32>
    %282 = vector.extract_strided_slice %270 {offsets = [0, 32], sizes = [8, 16], strides = [1, 1]} : vector<8x48xf32> to vector<8x16xf32>
    %283 = vector.broadcast %155 : vector<1x16xf32> to vector<8x16xf32>
    %284 = arith.addf %282, %283 : vector<8x16xf32>
    %285 = arith.mulf %279, %284 : vector<8x16xf32>
    %286 = arith.addf %281, %285 : vector<8x16xf32>
    %287 = math.tanh %286 : vector<8x16xf32>
    %cst_54 = arith.constant 1.000000e+00 : f32
    %288 = vector.broadcast %cst_54 : f32 to vector<8x16xf32>
    %289 = arith.subf %288, %280 : vector<8x16xf32>
    %290 = arith.mulf %289, %287 : vector<8x16xf32>
    %291 = arith.mulf %280, %268 : vector<8x16xf32>
    %292 = arith.addf %290, %291 : vector<8x16xf32>
    %c1 = arith.constant 1 : index
    %c0_55 = arith.constant 0 : index
    %c0_56 = arith.constant 0 : index
    %293 = vector.load %arg14[%c1, %c0_55, %c0_56] : memref<2x8x16xf32, #tpu.memory_space<vmem>>, vector<1x8x16xf32>
    %294 = vector.shape_cast %293 : vector<1x8x16xf32> to vector<8x16xf32>
    %295 = vector.shape_cast %292 : vector<8x16xf32> to vector<1x8x16xf32>
    tpu.vector_store %arg14[%c1, %c0_55, %c0_56], %295 {strides = array<i32>} : memref<2x8x16xf32, #tpu.memory_space<vmem>>, vector<1x8x16xf32>,
    %296 = vector.extract_strided_slice %172 {offsets = [0, 0], sizes = [1, 16], strides = [1, 1]} : vector<8x16xf32> to vector<1x16xf32>
    %297 = vector.extract_strided_slice %196 {offsets = [0, 0], sizes = [1, 16], strides = [1, 1]} : vector<8x16xf32> to vector<1x16xf32>
    %298 = vector.extract_strided_slice %220 {offsets = [0, 0], sizes = [1, 16], strides = [1, 1]} : vector<8x16xf32> to vector<1x16xf32>
    %299 = vector.extract_strided_slice %244 {offsets = [0, 0], sizes = [1, 16], strides = [1, 1]} : vector<8x16xf32> to vector<1x16xf32>
    %300 = vector.extract_strided_slice %268 {offsets = [0, 0], sizes = [1, 16], strides = [1, 1]} : vector<8x16xf32> to vector<1x16xf32>
    %301 = vector.extract_strided_slice %292 {offsets = [0, 0], sizes = [1, 16], strides = [1, 1]} : vector<8x16xf32> to vector<1x16xf32>
    %302 = tpu.concatenate %296, %297, %298, %299, %300, %301 in 0 : vector<1x16xf32>, vector<1x16xf32>, vector<1x16xf32>, vector<1x16xf32>, vector<1x16xf32>, vector<1x16xf32> -> vector<6x16xf32>
    %303 = vector.extract_strided_slice %172 {offsets = [1, 0], sizes = [1, 16], strides = [1, 1]} : vector<8x16xf32> to vector<1x16xf32>
    %304 = vector.extract_strided_slice %196 {offsets = [1, 0], sizes = [1, 16], strides = [1, 1]} : vector<8x16xf32> to vector<1x16xf32>
    %305 = vector.extract_strided_slice %220 {offsets = [1, 0], sizes = [1, 16], strides = [1, 1]} : vector<8x16xf32> to vector<1x16xf32>
    %306 = vector.extract_strided_slice %244 {offsets = [1, 0], sizes = [1, 16], strides = [1, 1]} : vector<8x16xf32> to vector<1x16xf32>
    %307 = vector.extract_strided_slice %268 {offsets = [1, 0], sizes = [1, 16], strides = [1, 1]} : vector<8x16xf32> to vector<1x16xf32>
    %308 = vector.extract_strided_slice %292 {offsets = [1, 0], sizes = [1, 16], strides = [1, 1]} : vector<8x16xf32> to vector<1x16xf32>
    %309 = tpu.concatenate %303, %304, %305, %306, %307, %308 in 0 : vector<1x16xf32>, vector<1x16xf32>, vector<1x16xf32>, vector<1x16xf32>, vector<1x16xf32>, vector<1x16xf32> -> vector<6x16xf32>
    %310 = vector.extract_strided_slice %172 {offsets = [2, 0], sizes = [1, 16], strides = [1, 1]} : vector<8x16xf32> to vector<1x16xf32>
    %311 = vector.extract_strided_slice %196 {offsets = [2, 0], sizes = [1, 16], strides = [1, 1]} : vector<8x16xf32> to vector<1x16xf32>
    %312 = vector.extract_strided_slice %220 {offsets = [2, 0], sizes = [1, 16], strides = [1, 1]} : vector<8x16xf32> to vector<1x16xf32>
    %313 = vector.extract_strided_slice %244 {offsets = [2, 0], sizes = [1, 16], strides = [1, 1]} : vector<8x16xf32> to vector<1x16xf32>
    %314 = vector.extract_strided_slice %268 {offsets = [2, 0], sizes = [1, 16], strides = [1, 1]} : vector<8x16xf32> to vector<1x16xf32>
    %315 = vector.extract_strided_slice %292 {offsets = [2, 0], sizes = [1, 16], strides = [1, 1]} : vector<8x16xf32> to vector<1x16xf32>
    %316 = tpu.concatenate %310, %311, %312, %313, %314, %315 in 0 : vector<1x16xf32>, vector<1x16xf32>, vector<1x16xf32>, vector<1x16xf32>, vector<1x16xf32>, vector<1x16xf32> -> vector<6x16xf32>
    %317 = vector.extract_strided_slice %172 {offsets = [3, 0], sizes = [1, 16], strides = [1, 1]} : vector<8x16xf32> to vector<1x16xf32>
    %318 = vector.extract_strided_slice %196 {offsets = [3, 0], sizes = [1, 16], strides = [1, 1]} : vector<8x16xf32> to vector<1x16xf32>
    %319 = vector.extract_strided_slice %220 {offsets = [3, 0], sizes = [1, 16], strides = [1, 1]} : vector<8x16xf32> to vector<1x16xf32>
    %320 = vector.extract_strided_slice %244 {offsets = [3, 0], sizes = [1, 16], strides = [1, 1]} : vector<8x16xf32> to vector<1x16xf32>
    %321 = vector.extract_strided_slice %268 {offsets = [3, 0], sizes = [1, 16], strides = [1, 1]} : vector<8x16xf32> to vector<1x16xf32>
    %322 = vector.extract_strided_slice %292 {offsets = [3, 0], sizes = [1, 16], strides = [1, 1]} : vector<8x16xf32> to vector<1x16xf32>
    %323 = tpu.concatenate %317, %318, %319, %320, %321, %322 in 0 : vector<1x16xf32>, vector<1x16xf32>, vector<1x16xf32>, vector<1x16xf32>, vector<1x16xf32>, vector<1x16xf32> -> vector<6x16xf32>
    %324 = tpu.concatenate %302, %309, %316, %323 in 1 : vector<6x16xf32>, vector<6x16xf32>, vector<6x16xf32>, vector<6x16xf32> -> vector<6x64xf32>
    %c0_57 = arith.constant 0 : index
    %c0_58 = arith.constant 0 : index
    %325 = vector.load %arg9[%c0_57, %c0_58] : memref<64x32xf32, #tpu.memory_space<vmem>>, vector<64x32xf32>
    %cst_59 = arith.constant dense<0.000000e+00> : vector<6x32xf32>
    %326 = tpu.matmul %324, %325, %cst_59 {dimension_numbers = #tpu.dot_dimension_numbers<[1], [0], [0], [1], [0, 0, 1, 1], [], []>} : vector<6x64xf32>, vector<64x32xf32>, vector<6x32xf32> -> vector<6x32xf32>
    %c0_60 = arith.constant 0 : index
    %c0_61 = arith.constant 0 : index
    %327 = vector.load %arg10[%c0_60, %c0_61] : memref<1x32xf32, #tpu.memory_space<vmem>>, vector<1x32xf32>
    %328 = vector.broadcast %327 : vector<1x32xf32> to vector<6x32xf32>
    %329 = arith.addf %326, %328 : vector<6x32xf32>
    %cst_62 = arith.constant 0.000000e+00 : f32
    %330 = vector.broadcast %cst_62 : f32 to vector<6x32xf32>
    %331 = arith.maximumf %329, %330 : vector<6x32xf32>
    %c0_63 = arith.constant 0 : index
    %c0_64 = arith.constant 0 : index
    %332 = vector.load %arg11[%c0_63, %c0_64] : memref<32x128xf32, #tpu.memory_space<vmem>>, vector<32x128xf32>
    %cst_65 = arith.constant dense<0.000000e+00> : vector<6x128xf32>
    %333 = tpu.matmul %331, %332, %cst_65 {dimension_numbers = #tpu.dot_dimension_numbers<[1], [0], [0], [1], [0, 0, 1, 1], [], []>} : vector<6x32xf32>, vector<32x128xf32>, vector<6x128xf32> -> vector<6x128xf32>
    %c0_66 = arith.constant 0 : index
    %c0_67 = arith.constant 0 : index
    %334 = vector.load %arg12[%c0_66, %c0_67] : memref<1x128xf32, #tpu.memory_space<vmem>>, vector<1x128xf32>
    %335 = vector.broadcast %334 : vector<1x128xf32> to vector<6x128xf32>
    %336 = arith.addf %333, %335 : vector<6x128xf32>
    %c0_68 = arith.constant 0 : index
    %c0_69 = arith.constant 0 : index
    %337 = vector.load %arg13[%c0_68, %c0_69] : memref<6x128xf32, #tpu.memory_space<vmem>>, vector<6x128xf32>
    tpu.vector_store %arg13[%c0_68, %c0_69], %336 {strides = array<i32>} : memref<6x128xf32, #tpu.memory_space<vmem>>, vector<6x128xf32>,
    return
  }
}

</mosaic_0001>

<llo_original>
// kernel: m03_forward.1
$region0: #{m03_forward.1}
  #allocation0 [shape = 'u32[]', space=smem, size = 0x4, offset = 0x4, fixed_abs, tag = 'smem constant byte address 0x4 - core index']
  #allocation1 [shape = 'u32[144,128]{1,0:T(1,128)}', space=vmem, size = 0x12000, scoped, tag = 'internal scratch']
  %s0 = inlined_call_operand.vmem [shape: f32[48,8], index: 0, kind: input, shape index: {}]
  %s1 = inlined_call_operand.vmem [shape: f32[8,48], index: 1, kind: input, shape index: {}]
  %s2 = inlined_call_operand.vmem [shape: f32[16,48], index: 2, kind: input, shape index: {}]
  %s3 = inlined_call_operand.vmem [shape: f32[1,48], index: 3, kind: input, shape index: {}]
  %s4 = inlined_call_operand.vmem [shape: f32[1,16], index: 4, kind: input, shape index: {}]
  %s5 = inlined_call_operand.vmem [shape: f32[16,48], index: 5, kind: input, shape index: {}]
  %s6 = inlined_call_operand.vmem [shape: f32[16,48], index: 6, kind: input, shape index: {}]
  %s7 = inlined_call_operand.vmem [shape: f32[1,48], index: 7, kind: input, shape index: {}]
  %s8 = inlined_call_operand.vmem [shape: f32[1,16], index: 8, kind: input, shape index: {}]
  %s9 = inlined_call_operand.vmem [shape: f32[64,32], index: 9, kind: input, shape index: {}]
  %s10 = inlined_call_operand.vmem [shape: f32[1,32], index: 10, kind: input, shape index: {}]
  %s11 = inlined_call_operand.vmem [shape: f32[32,128], index: 11, kind: input, shape index: {}]
  %s12 = inlined_call_operand.vmem [shape: f32[1,128], index: 12, kind: input, shape index: {}]
  %s13 = inlined_call_operand.vmem [shape: f32[6,128], index: 13, kind: output, shape index: {0}]
  %s14 = inlined_call_operand.vmem [shape: f32[2,8,16], index: 14, kind: output, shape index: {1}]
  %15 = xla_tuple %s13, %s14
  %s16 = sld [smem:[#allocation0]]
  $region70: #{m03_forward.1} parent=0
    _
  %s18 = ssub.s32 1, %s16
  %s19 = scalar_select 0, %s18, %s16
  // Predicated region
  $region2: #{m03_forward.1} parent=0 // pred_check
    _
  $region3: #{m03_forward.1} parent=0 // pred_check_branch
    %21 = sbr.rel (0) target = $region5
  $region4: #{m03_forward.1} parent=0 // pred_region
    _
  $region5: #{m03_forward.1} parent=0 // pred_fallthru
    _
  // Predicated region
  $region6: #{m03_forward.1} parent=0 // pred_check
    _
  $region7: #{m03_forward.1} parent=0 // pred_check_branch
    %23 = sbr.rel (0) target = $region9
  $region8: #{m03_forward.1} parent=0 // pred_region
    _
  $region9: #{m03_forward.1} parent=0 // pred_fallthru
    _
  // Predicated region
  $region10: #{m03_forward.1} parent=0 // pred_check
    _
  $region11: #{m03_forward.1} parent=0 // pred_check_branch
    %25 = sbr.rel (0) target = $region13
  $region12: #{m03_forward.1} parent=0 // pred_region
    _
  $region13: #{m03_forward.1} parent=0 // pred_fallthru
    _
  // Predicated region
  $region14: #{m03_forward.1} parent=0 // pred_check
    _
  $region15: #{m03_forward.1} parent=0 // pred_check_branch
    %27 = sbr.rel (0) target = $region17
  $region16: #{m03_forward.1} parent=0 // pred_region
    _
  $region17: #{m03_forward.1} parent=0 // pred_fallthru
    _
  // Predicated region
  $region18: #{m03_forward.1} parent=0 // pred_check
    _
  $region19: #{m03_forward.1} parent=0 // pred_check_branch
    %29 = sbr.rel (0) target = $region21
  $region20: #{m03_forward.1} parent=0 // pred_region
    _
  $region21: #{m03_forward.1} parent=0 // pred_fallthru
    _
  // Predicated region
  $region22: #{m03_forward.1} parent=0 // pred_check
    _
  $region23: #{m03_forward.1} parent=0 // pred_check_branch
    %31 = sbr.rel (0) target = $region25
  $region24: #{m03_forward.1} parent=0 // pred_region
    _
  $region25: #{m03_forward.1} parent=0 // pred_fallthru
    _
  // Predicated region
  $region26: #{m03_forward.1} parent=0 // pred_check
    _
  $region27: #{m03_forward.1} parent=0 // pred_check_branch
    %33 = sbr.rel (0) target = $region29
  $region28: #{m03_forward.1} parent=0 // pred_region
    _
  $region29: #{m03_forward.1} parent=0 // pred_fallthru
    _
  // Predicated region
  $region30: #{m03_forward.1} parent=0 // pred_check
    _
  $region31: #{m03_forward.1} parent=0 // pred_check_branch
    %35 = sbr.rel (0) target = $region33
  $region32: #{m03_forward.1} parent=0 // pred_region
    _
  $region33: #{m03_forward.1} parent=0 // pred_fallthru
    _
  // Predicated region
  $region34: #{m03_forward.1} parent=0 // pred_check
    _
  $region35: #{m03_forward.1} parent=0 // pred_check_branch
    %37 = sbr.rel (0) target = $region37
  $region36: #{m03_forward.1} parent=0 // pred_region
    _
  $region37: #{m03_forward.1} parent=0 // pred_fallthru
    _
  // Predicated region
  $region38: #{m03_forward.1} parent=0 // pred_check
    _
  $region39: #{m03_forward.1} parent=0 // pred_check_branch
    %39 = sbr.rel (0) target = $region41
  $region40: #{m03_forward.1} parent=0 // pred_region
    _
  $region41: #{m03_forward.1} parent=0 // pred_fallthru
    _
  // Predicated region
  $region42: #{m03_forward.1} parent=0 // pred_check
    _
  $region43: #{m03_forward.1} parent=0 // pred_check_branch
    %41 = sbr.rel (0) target = $region45
  $region44: #{m03_forward.1} parent=0 // pred_region
    _
  $region45: #{m03_forward.1} parent=0 // pred_fallthru
    _
  // Predicated region
  $region46: #{m03_forward.1} parent=0 // pred_check
    _
  $region47: #{m03_forward.1} parent=0 // pred_check_branch
    %43 = sbr.rel (0) target = $region49
  $region48: #{m03_forward.1} parent=0 // pred_region
    _
  $region49: #{m03_forward.1} parent=0 // pred_fallthru
    _
  // Predicated region
  $region50: #{m03_forward.1} parent=0 // pred_check
    _
  $region51: #{m03_forward.1} parent=0 // pred_check_branch
    %45 = sbr.rel (0) target = $region53
  $region52: #{m03_forward.1} parent=0 // pred_region
    _
  $region53: #{m03_forward.1} parent=0 // pred_fallthru
    _
  %v46 = vld [vmem:[%s0] sm:$0xff]
  %v47 = vld [vmem:[%s0 + $0x8] sm:$0xff]
  %v48 = vld [vmem:[%s0 + $0x10] sm:$0xff]
  %v49 = vld [vmem:[%s0 + $0x18] sm:$0xff]
  %v50 = vld [vmem:[%s0 + $0x20] sm:$0xff]
  %v51 = vld [vmem:[%s0 + $0x28] sm:$0xff]
  %v52 = vld [vmem:[%s1] sm:$0xff]
  %v53 = vld [vmem:[%s3] sm:$0x1]
  %v55 = vlaneseq
  %v56 = vshrl.u32 %v55, 7
  %v57 = vsub.s32 0, %v56
  %v58 = vrot.slane %v53, %v57
  %vm60 = vcmask 64512
  %v62 = vsel %vm60, %v46, 0
  %v65 = vsel %vm60, %v47, 0
  %v68 = vsel %vm60, %v48, 0
  %v71 = vsel %vm60, %v49, 0
  %v74 = vsel %vm60, %v50, 0
  %v77 = vsel %vm60, %v51, 0
  %79 = vmatprep.subr.mxu0 0.0
  %80 = vmatpush1.msra.mxu0 %v52
  %81 = vmatprep.subr.mxu0 0.0
  %82 = vmatpush1.msra.mxu0 0.0
  %83 = vmatprep.subr.mxu0 0.0
  %84 = vmatpush1.msra.mxu0 0.0
  %85 = vmatprep.subr.mxu0 0.0
  %86 = vmatpush1.msra.mxu0 0.0
  %87 = vmatprep.subr.mxu0 0.0
  %88 = vmatpush1.msra.mxu0 0.0
  %89 = vmatprep.subr.mxu0 0.0
  %90 = vmatpush1.msra.mxu0 0.0
  %91 = vmatprep.subr.mxu0 0.0
  %92 = vmatpush1.msra.mxu0 0.0
  %93 = vmatprep.subr.mxu0 0.0
  %94 = vmatpush1.msra.mxu0 0.0
  %95 = vmatprep.subr.mxu0 0.0
  %96 = vmatpush1.msra.mxu0 0.0
  %97 = vmatprep.subr.mxu0 0.0
  %98 = vmatpush1.msra.mxu0 0.0
  %99 = vmatprep.subr.mxu0 0.0
  %100 = vmatpush1.msra.mxu0 0.0
  %101 = vmatprep.subr.mxu0 0.0
  %102 = vmatpush1.msra.mxu0 0.0
  %103 = vmatprep.subr.mxu0 0.0
  %104 = vmatpush1.msra.mxu0 0.0
  %105 = vmatprep.subr.mxu0 0.0
  %106 = vmatpush1.msra.mxu0 0.0
  %107 = vmatprep.subr.mxu0 0.0
  %108 = vmatpush1.msra.mxu0 0.0
  %109 = vmatprep.subr.mxu0 0.0
  %110 = vmatpush1.msra.mxu0 0.0
  %111 = vmatprep.subr.mxu0 0.0
  %112 = vmatpush1.msra.mxu0 0.0
  %113 = vmatprep.subr.mxu0 0.0
  %114 = vmatpush1.msra.mxu0 0.0
  %115 = vmatprep.subr.mxu0 0.0
  %116 = vmatpush1.msra.mxu0 0.0
  %117 = vmatprep.subr.mxu0 0.0
  %118 = vmatpush1.msra.mxu0 0.0
  %119 = vmatprep.subr.mxu0 0.0
  %120 = vmatpush1.msra.mxu0 0.0
  %121 = vmatprep.subr.mxu0 0.0
  %122 = vmatpush1.msra.mxu0 0.0
  %123 = vmatprep.subr.mxu0 0.0
  %124 = vmatpush1.msra.mxu0 0.0
  %125 = vmatprep.subr.mxu0 0.0
  %126 = vmatpush1.msra.mxu0 0.0
  %127 = vmatprep.subr.mxu0 0.0
  %128 = vmatpush1.msra.mxu0 0.0
  %129 = vmatprep.subr.mxu0 0.0
  %130 = vmatpush1.msra.mxu0 0.0
  %131 = vmatprep.subr.mxu0 0.0
  %132 = vmatpush1.msra.mxu0 0.0
  %133 = vmatprep.subr.mxu0 0.0
  %134 = vmatpush1.msra.mxu0 0.0
  %135 = vmatprep.subr.mxu0 0.0
  %136 = vmatpush1.msra.mxu0 0.0
  %137 = vmatprep.subr.mxu0 0.0
  %138 = vmatpush1.msra.mxu0 0.0
  %139 = vmatprep.subr.mxu0 0.0
  %140 = vmatpush1.msra.mxu0 0.0
  %141 = vmatprep.subr.mxu0 0.0
  %142 = vmatpush1.msra.mxu0 0.0
  %143 = vmatprep.mubr.f32.mxu0 0.0
  %144 = vmatmul.mubr.f32.gmra.mrb[0].mxu0 %v62
  %v145 = vpop.f32.mrb[0].mxu0
  %v146 = vadd.f32 %v58, %v145
  %v147 = vpop.f32.mrb[0].mxu0
  %148 = vmatprep.mubr.f32.mxu0 0.0
  %149 = vmatmul.mubr.f32.gmra.mrb[0].mxu0 %v65
  %v150 = vpop.f32.mrb[0].mxu0
  %v151 = vadd.f32 %v58, %v150
  %v152 = vpop.f32.mrb[0].mxu0
  %153 = vmatprep.mubr.f32.mxu0 0.0
  %154 = vmatmul.mubr.f32.gmra.mrb[0].mxu0 %v68
  %v155 = vpop.f32.mrb[0].mxu0
  %v156 = vadd.f32 %v58, %v155
  %v157 = vpop.f32.mrb[0].mxu0
  %158 = vmatprep.mubr.f32.mxu0 0.0
  %159 = vmatmul.mubr.f32.gmra.mrb[0].mxu0 %v71
  %v160 = vpop.f32.mrb[0].mxu0
  %v161 = vadd.f32 %v58, %v160
  %v162 = vpop.f32.mrb[0].mxu0
  %163 = vmatprep.mubr.f32.mxu0 0.0
  %164 = vmatmul.mubr.f32.gmra.mrb[0].mxu0 %v74
  %v165 = vpop.f32.mrb[0].mxu0
  %v166 = vadd.f32 %v58, %v165
  %v167 = vpop.f32.mrb[0].mxu0
  %168 = vmatprep.mubr.f32.mxu0 0.0
  %169 = vmatmul.mubr.f32.gmra.mrb[0].mxu0 %v77
  %v170 = vpop.f32.mrb[0].mxu0
  %v171 = vadd.f32 %v58, %v170
  %v172 = vpop.f32.mrb[0].mxu0
  %173 = vdwg.mxu0
  %v174 = vld [vmem:[%s2] sm:$0xff]
  %v175 = vld [vmem:[%s2 + $0x8] sm:$0xff]
  %v176 = vld [vmem:[%s4] sm:$0x1]
  %v177 = vxor.u32 %v146, 2147483648
  %v178 = vmul.f32 %v177, 1.442695
  %v179 = vpow.pop %v178
  %v180 = vadd.f32 %v179, 1.0
  %v181 = vrcp.pop %v180
  %v182 = vmul.f32 1.0, %v181
  %v184 = vlaneseq
  %v185 = vshrl.u32 %v184, 7
  %v186 = vsub.s32 0, %v185
  %v187 = vrot.slane %v176, %v186
  %v189 = vmul.f32 %v182, %v187
  %191 = vrot.lane.b32.xlu0 %v189, 32
  %v192 = vpop.permute.xlu0 %191
  %v194 = vadd.f32 %v146, %v192
  %v195 = vtanh.pop %v194
  %v196 = vsub.f32 1.0, %v182
  %198 = vrot.lane.b32.xlu0 %v195, 112
  %v199 = vpop.permute.xlu0 %198
  %v201 = vmul.f32 %v196, %v199
  %203 = vrot.lane.b32.xlu0 %v201, 112
  %v204 = vpop.permute.xlu0 %203
  %vm205 = vcmask 130048
  %v206 = vsel %vm205, %v204, 0
  %208 = vmatprep.subr.mxu0 0.0
  %209 = vmatpush1.msra.mxu0 %v174
  %210 = vmatprep.subr.mxu0 0.0
  %211 = vmatpush1.msra.mxu0 %v175
  %212 = vmatprep.subr.mxu0 0.0
  %213 = vmatpush1.msra.mxu0 0.0
  %214 = vmatprep.subr.mxu0 0.0
  %215 = vmatpush1.msra.mxu0 0.0
  %216 = vmatprep.subr.mxu0 0.0
  %217 = vmatpush1.msra.mxu0 0.0
  %218 = vmatprep.subr.mxu0 0.0
  %219 = vmatpush1.msra.mxu0 0.0
  %220 = vmatprep.subr.mxu0 0.0
  %221 = vmatpush1.msra.mxu0 0.0
  %222 = vmatprep.subr.mxu0 0.0
  %223 = vmatpush1.msra.mxu0 0.0
  %224 = vmatprep.subr.mxu0 0.0
  %225 = vmatpush1.msra.mxu0 0.0
  %226 = vmatprep.subr.mxu0 0.0
  %227 = vmatpush1.msra.mxu0 0.0
  %228 = vmatprep.subr.mxu0 0.0
  %229 = vmatpush1.msra.mxu0 0.0
  %230 = vmatprep.subr.mxu0 0.0
  %231 = vmatpush1.msra.mxu0 0.0
  %232 = vmatprep.subr.mxu0 0.0
  %233 = vmatpush1.msra.mxu0 0.0
  %234 = vmatprep.subr.mxu0 0.0
  %235 = vmatpush1.msra.mxu0 0.0
  %236 = vmatprep.subr.mxu0 0.0
  %237 = vmatpush1.msra.mxu0 0.0
  %238 = vmatprep.subr.mxu0 0.0
  %239 = vmatpush1.msra.mxu0 0.0
  %240 = vmatprep.subr.mxu0 0.0
  %241 = vmatpush1.msra.mxu0 0.0
  %242 = vmatprep.subr.mxu0 0.0
  %243 = vmatpush1.msra.mxu0 0.0
  %244 = vmatprep.subr.mxu0 0.0
  %245 = vmatpush1.msra.mxu0 0.0
  %246 = vmatprep.subr.mxu0 0.0
  %247 = vmatpush1.msra.mxu0 0.0
  %248 = vmatprep.subr.mxu0 0.0
  %249 = vmatpush1.msra.mxu0 0.0
  %250 = vmatprep.subr.mxu0 0.0
  %251 = vmatpush1.msra.mxu0 0.0
  %252 = vmatprep.subr.mxu0 0.0
  %253 = vmatpush1.msra.mxu0 0.0
  %254 = vmatprep.subr.mxu0 0.0
  %255 = vmatpush1.msra.mxu0 0.0
  %256 = vmatprep.subr.mxu0 0.0
  %257 = vmatpush1.msra.mxu0 0.0
  %258 = vmatprep.subr.mxu0 0.0
  %259 = vmatpush1.msra.mxu0 0.0
  %260 = vmatprep.subr.mxu0 0.0
  %261 = vmatpush1.msra.mxu0 0.0
  %262 = vmatprep.subr.mxu0 0.0
  %263 = vmatpush1.msra.mxu0 0.0
  %264 = vmatprep.subr.mxu0 0.0
  %265 = vmatpush1.msra.mxu0 0.0
  %266 = vmatprep.subr.mxu0 0.0
  %267 = vmatpush1.msra.mxu0 0.0
  %268 = vmatprep.subr.mxu0 0.0
  %269 = vmatpush1.msra.mxu0 0.0
  %270 = vmatprep.subr.mxu0 0.0
  %271 = vmatpush1.msra.mxu0 0.0
  %272 = vmatprep.mubr.f32.mxu0 0.0
  %273 = vmatmul.mubr.f32.gmra.mrb[0].mxu0 %v206
  %v274 = vpop.f32.mrb[0].mxu0
  %v275 = vadd.f32 0.0, %v274
  %v276 = vpop.f32.mrb[0].mxu0
  %277 = vdwg.mxu0
  %v278 = vadd.f32 %v151, %v275
  %v279 = vxor.u32 %v278, 2147483648
  %v280 = vmul.f32 %v279, 1.442695
  %v281 = vpow.pop %v280
  %v282 = vadd.f32 %v281, 1.0
  %v283 = vrcp.pop %v282
  %v284 = vmul.f32 1.0, %v283
  %285 = vrot.lane.b32.xlu0 %v187, 32
  %v286 = vpop.permute.xlu0 %285
  %v288 = vadd.f32 %v275, %v286
  %290 = vrot.lane.b32.xlu0 %v288, 96
  %v291 = vpop.permute.xlu0 %290
  %v293 = vmul.f32 %v284, %v291
  %295 = vrot.lane.b32.xlu0 %v293, 32
  %v296 = vpop.permute.xlu0 %295
  %v298 = vadd.f32 %v151, %v296
  %v299 = vtanh.pop %v298
  %v300 = vsub.f32 1.0, %v284
  %302 = vrot.lane.b32.xlu0 %v299, 112
  %v303 = vpop.permute.xlu0 %302
  %v305 = vmul.f32 %v300, %v303
  %v306 = vmul.f32 %v284, %v201
  %v307 = vadd.f32 %v305, %v306
  %309 = vrot.lane.b32.xlu0 %v307, 112
  %v310 = vpop.permute.xlu0 %309
  %v311 = vsel %vm205, %v310, 0
  %313 = vmatprep.subr.mxu0 0.0
  %314 = vmatpush1.msra.mxu0 %v174
  %315 = vmatprep.subr.mxu0 0.0
  %316 = vmatpush1.msra.mxu0 %v175
  %317 = vmatprep.subr.mxu0 0.0
  %318 = vmatpush1.msra.mxu0 0.0
  %319 = vmatprep.subr.mxu0 0.0
  %320 = vmatpush1.msra.mxu0 0.0
  %321 = vmatprep.subr.mxu0 0.0
  %322 = vmatpush1.msra.mxu0 0.0
  %323 = vmatprep.subr.mxu0 0.0
  %324 = vmatpush1.msra.mxu0 0.0
  %325 = vmatprep.subr.mxu0 0.0
  %326 = vmatpush1.msra.mxu0 0.0
  %327 = vmatprep.subr.mxu0 0.0
  %328 = vmatpush1.msra.mxu0 0.0
  %329 = vmatprep.subr.mxu0 0.0
  %330 = vmatpush1.msra.mxu0 0.0
  %331 = vmatprep.subr.mxu0 0.0
  %332 = vmatpush1.msra.mxu0 0.0
  %333 = vmatprep.subr.mxu0 0.0
  %334 = vmatpush1.msra.mxu0 0.0
  %335 = vmatprep.subr.mxu0 0.0
  %336 = vmatpush1.msra.mxu0 0.0
  %337 = vmatprep.subr.mxu0 0.0
  %338 = vmatpush1.msra.mxu0 0.0
  %339 = vmatprep.subr.mxu0 0.0
  %340 = vmatpush1.msra.mxu0 0.0
  %341 = vmatprep.subr.mxu0 0.0
  %342 = vmatpush1.msra.mxu0 0.0
  %343 = vmatprep.subr.mxu0 0.0
  %344 = vmatpush1.msra.mxu0 0.0
  %345 = vmatprep.subr.mxu0 0.0
  %346 = vmatpush1.msra.mxu0 0.0
  %347 = vmatprep.subr.mxu0 0.0
  %348 = vmatpush1.msra.mxu0 0.0
  %349 = vmatprep.subr.mxu0 0.0
  %350 = vmatpush1.msra.mxu0 0.0
  %351 = vmatprep.subr.mxu0 0.0
  %352 = vmatpush1.msra.mxu0 0.0
  %353 = vmatprep.subr.mxu0 0.0
  %354 = vmatpush1.msra.mxu0 0.0
  %355 = vmatprep.subr.mxu0 0.0
  %356 = vmatpush1.msra.mxu0 0.0
  %357 = vmatprep.subr.mxu0 0.0
  %358 = vmatpush1.msra.mxu0 0.0
  %359 = vmatprep.subr.mxu0 0.0
  %360 = vmatpush1.msra.mxu0 0.0
  %361 = vmatprep.subr.mxu0 0.0
  %362 = vmatpush1.msra.mxu0 0.0
  %363 = vmatprep.subr.mxu0 0.0
  %364 = vmatpush1.msra.mxu0 0.0
  %365 = vmatprep.subr.mxu0 0.0
  %366 = vmatpush1.msra.mxu0 0.0
  %367 = vmatprep.subr.mxu0 0.0
  %368 = vmatpush1.msra.mxu0 0.0
  %369 = vmatprep.subr.mxu0 0.0
  %370 = vmatpush1.msra.mxu0 0.0
  %371 = vmatprep.subr.mxu0 0.0
  %372 = vmatpush1.msra.mxu0 0.0
  %373 = vmatprep.subr.mxu0 0.0
  %374 = vmatpush1.msra.mxu0 0.0
  %375 = vmatprep.subr.mxu0 0.0
  %376 = vmatpush1.msra.mxu0 0.0
  %377 = vmatprep.mubr.f32.mxu0 0.0
  %378 = vmatmul.mubr.f32.gmra.mrb[0].mxu0 %v311
  %v379 = vpop.f32.mrb[0].mxu0
  %v380 = vadd.f32 0.0, %v379
  %v381 = vpop.f32.mrb[0].mxu0
  %382 = vdwg.mxu0
  %v383 = vadd.f32 %v156, %v380
  %v384 = vxor.u32 %v383, 2147483648
  %v385 = vmul.f32 %v384, 1.442695
  %v386 = vpow.pop %v385
  %v387 = vadd.f32 %v386, 1.0
  %v388 = vrcp.pop %v387
  %v389 = vmul.f32 1.0, %v388
  %v390 = vadd.f32 %v380, %v286
  %392 = vrot.lane.b32.xlu0 %v390, 96
  %v393 = vpop.permute.xlu0 %392
  %v395 = vmul.f32 %v389, %v393
  %397 = vrot.lane.b32.xlu0 %v395, 32
  %v398 = vpop.permute.xlu0 %397
  %v400 = vadd.f32 %v156, %v398
  %v401 = vtanh.pop %v400
  %v402 = vsub.f32 1.0, %v389
  %404 = vrot.lane.b32.xlu0 %v401, 112
  %v405 = vpop.permute.xlu0 %404
  %v407 = vmul.f32 %v402, %v405
  %v408 = vmul.f32 %v389, %v307
  %v409 = vadd.f32 %v407, %v408
  %411 = vrot.lane.b32.xlu0 %v409, 112
  %v412 = vpop.permute.xlu0 %411
  %v413 = vsel %vm205, %v412, 0
  %415 = vmatprep.subr.mxu0 0.0
  %416 = vmatpush1.msra.mxu0 %v174
  %417 = vmatprep.subr.mxu0 0.0
  %418 = vmatpush1.msra.mxu0 %v175
  %419 = vmatprep.subr.mxu0 0.0
  %420 = vmatpush1.msra.mxu0 0.0
  %421 = vmatprep.subr.mxu0 0.0
  %422 = vmatpush1.msra.mxu0 0.0
  %423 = vmatprep.subr.mxu0 0.0
  %424 = vmatpush1.msra.mxu0 0.0
  %425 = vmatprep.subr.mxu0 0.0
  %426 = vmatpush1.msra.mxu0 0.0
  %427 = vmatprep.subr.mxu0 0.0
  %428 = vmatpush1.msra.mxu0 0.0
  %429 = vmatprep.subr.mxu0 0.0
  %430 = vmatpush1.msra.mxu0 0.0
  %431 = vmatprep.subr.mxu0 0.0
  %432 = vmatpush1.msra.mxu0 0.0
  %433 = vmatprep.subr.mxu0 0.0
  %434 = vmatpush1.msra.mxu0 0.0
  %435 = vmatprep.subr.mxu0 0.0
  %436 = vmatpush1.msra.mxu0 0.0
  %437 = vmatprep.subr.mxu0 0.0
  %438 = vmatpush1.msra.mxu0 0.0
  %439 = vmatprep.subr.mxu0 0.0
  %440 = vmatpush1.msra.mxu0 0.0
  %441 = vmatprep.subr.mxu0 0.0
  %442 = vmatpush1.msra.mxu0 0.0
  %443 = vmatprep.subr.mxu0 0.0
  %444 = vmatpush1.msra.mxu0 0.0
  %445 = vmatprep.subr.mxu0 0.0
  %446 = vmatpush1.msra.mxu0 0.0
  %447 = vmatprep.subr.mxu0 0.0
  %448 = vmatpush1.msra.mxu0 0.0
  %449 = vmatprep.subr.mxu0 0.0
  %450 = vmatpush1.msra.mxu0 0.0
  %451 = vmatprep.subr.mxu0 0.0
  %452 = vmatpush1.msra.mxu0 0.0
  %453 = vmatprep.subr.mxu0 0.0
  %454 = vmatpush1.msra.mxu0 0.0
  %455 = vmatprep.subr.mxu0 0.0
  %456 = vmatpush1.msra.mxu0 0.0
  %457 = vmatprep.subr.mxu0 0.0
  %458 = vmatpush1.msra.mxu0 0.0
  %459 = vmatprep.subr.mxu0 0.0
  %460 = vmatpush1.msra.mxu0 0.0
  %461 = vmatprep.subr.mxu0 0.0
  %462 = vmatpush1.msra.mxu0 0.0
  %463 = vmatprep.subr.mxu0 0.0
  %464 = vmatpush1.msra.mxu0 0.0
  %465 = vmatprep.subr.mxu0 0.0
  %466 = vmatpush1.msra.mxu0 0.0
  %467 = vmatprep.subr.mxu0 0.0
  %468 = vmatpush1.msra.mxu0 0.0
  %469 = vmatprep.subr.mxu0 0.0
  %470 = vmatpush1.msra.mxu0 0.0
  %471 = vmatprep.subr.mxu0 0.0
  %472 = vmatpush1.msra.mxu0 0.0
  %473 = vmatprep.subr.mxu0 0.0
  %474 = vmatpush1.msra.mxu0 0.0
  %475 = vmatprep.subr.mxu0 0.0
  %476 = vmatpush1.msra.mxu0 0.0
  %477 = vmatprep.subr.mxu0 0.0
  %478 = vmatpush1.msra.mxu0 0.0
  %479 = vmatprep.mubr.f32.mxu0 0.0
  %480 = vmatmul.mubr.f32.gmra.mrb[0].mxu0 %v413
  %v481 = vpop.f32.mrb[0].mxu0
  %v482 = vadd.f32 0.0, %v481
  %v483 = vpop.f32.mrb[0].mxu0
  %484 = vdwg.mxu0
  %v485 = vadd.f32 %v161, %v482
  %v486 = vxor.u32 %v485, 2147483648
  %v487 = vmul.f32 %v486, 1.442695
  %v488 = vpow.pop %v487
  %v489 = vadd.f32 %v488, 1.0
  %v490 = vrcp.pop %v489
  %v491 = vmul.f32 1.0, %v490
  %v492 = vadd.f32 %v482, %v286
  %494 = vrot.lane.b32.xlu0 %v492, 96
  %v495 = vpop.permute.xlu0 %494
  %v497 = vmul.f32 %v491, %v495
  %499 = vrot.lane.b32.xlu0 %v497, 32
  %v500 = vpop.permute.xlu0 %499
  %v502 = vadd.f32 %v161, %v500
  %v503 = vtanh.pop %v502
  %v504 = vsub.f32 1.0, %v491
  %506 = vrot.lane.b32.xlu0 %v503, 112
  %v507 = vpop.permute.xlu0 %506
  %v509 = vmul.f32 %v504, %v507
  %v510 = vmul.f32 %v491, %v409
  %v511 = vadd.f32 %v509, %v510
  %513 = vrot.lane.b32.xlu0 %v511, 112
  %v514 = vpop.permute.xlu0 %513
  %v515 = vsel %vm205, %v514, 0
  %517 = vmatprep.subr.mxu0 0.0
  %518 = vmatpush1.msra.mxu0 %v174
  %519 = vmatprep.subr.mxu0 0.0
  %520 = vmatpush1.msra.mxu0 %v175
  %521 = vmatprep.subr.mxu0 0.0
  %522 = vmatpush1.msra.mxu0 0.0
  %523 = vmatprep.subr.mxu0 0.0
  %524 = vmatpush1.msra.mxu0 0.0
  %525 = vmatprep.subr.mxu0 0.0
  %526 = vmatpush1.msra.mxu0 0.0
  %527 = vmatprep.subr.mxu0 0.0
  %528 = vmatpush1.msra.mxu0 0.0
  %529 = vmatprep.subr.mxu0 0.0
  %530 = vmatpush1.msra.mxu0 0.0
  %531 = vmatprep.subr.mxu0 0.0
  %532 = vmatpush1.msra.mxu0 0.0
  %533 = vmatprep.subr.mxu0 0.0
  %534 = vmatpush1.msra.mxu0 0.0
  %535 = vmatprep.subr.mxu0 0.0
  %536 = vmatpush1.msra.mxu0 0.0
  %537 = vmatprep.subr.mxu0 0.0
  %538 = vmatpush1.msra.mxu0 0.0
  %539 = vmatprep.subr.mxu0 0.0
  %540 = vmatpush1.msra.mxu0 0.0
  %541 = vmatprep.subr.mxu0 0.0
  %542 = vmatpush1.msra.mxu0 0.0
  %543 = vmatprep.subr.mxu0 0.0
  %544 = vmatpush1.msra.mxu0 0.0
  %545 = vmatprep.subr.mxu0 0.0
  %546 = vmatpush1.msra.mxu0 0.0
  %547 = vmatprep.subr.mxu0 0.0
  %548 = vmatpush1.msra.mxu0 0.0
  %549 = vmatprep.subr.mxu0 0.0
  %550 = vmatpush1.msra.mxu0 0.0
  %551 = vmatprep.subr.mxu0 0.0
  %552 = vmatpush1.msra.mxu0 0.0
  %553 = vmatprep.subr.mxu0 0.0
  %554 = vmatpush1.msra.mxu0 0.0
  %555 = vmatprep.subr.mxu0 0.0
  %556 = vmatpush1.msra.mxu0 0.0
  %557 = vmatprep.subr.mxu0 0.0
  %558 = vmatpush1.msra.mxu0 0.0
  %559 = vmatprep.subr.mxu0 0.0
  %560 = vmatpush1.msra.mxu0 0.0
  %561 = vmatprep.subr.mxu0 0.0
  %562 = vmatpush1.msra.mxu0 0.0
  %563 = vmatprep.subr.mxu0 0.0
  %564 = vmatpush1.msra.mxu0 0.0
  %565 = vmatprep.subr.mxu0 0.0
  %566 = vmatpush1.msra.mxu0 0.0
  %567 = vmatprep.subr.mxu0 0.0
  %568 = vmatpush1.msra.mxu0 0.0
  %569 = vmatprep.subr.mxu0 0.0
  %570 = vmatpush1.msra.mxu0 0.0
  %571 = vmatprep.subr.mxu0 0.0
  %572 = vmatpush1.msra.mxu0 0.0
  %573 = vmatprep.subr.mxu0 0.0
  %574 = vmatpush1.msra.mxu0 0.0
  %575 = vmatprep.subr.mxu0 0.0
  %576 = vmatpush1.msra.mxu0 0.0
  %577 = vmatprep.subr.mxu0 0.0
  %578 = vmatpush1.msra.mxu0 0.0
  %579 = vmatprep.subr.mxu0 0.0
  %580 = vmatpush1.msra.mxu0 0.0
  %581 = vmatprep.mubr.f32.mxu0 0.0
  %582 = vmatmul.mubr.f32.gmra.mrb[0].mxu0 %v515
  %v583 = vpop.f32.mrb[0].mxu0
  %v584 = vadd.f32 0.0, %v583
  %v585 = vpop.f32.mrb[0].mxu0
  %586 = vdwg.mxu0
  %v587 = vadd.f32 %v166, %v584
  %v588 = vxor.u32 %v587, 2147483648
  %v589 = vmul.f32 %v588, 1.442695
  %v590 = vpow.pop %v589
  %v591 = vadd.f32 %v590, 1.0
  %v592 = vrcp.pop %v591
  %v593 = vmul.f32 1.0, %v592
  %v594 = vadd.f32 %v584, %v286
  %596 = vrot.lane.b32.xlu0 %v594, 96
  %v597 = vpop.permute.xlu0 %596
  %v599 = vmul.f32 %v593, %v597
  %601 = vrot.lane.b32.xlu0 %v599, 32
  %v602 = vpop.permute.xlu0 %601
  %v604 = vadd.f32 %v166, %v602
  %v605 = vtanh.pop %v604
  %v606 = vsub.f32 1.0, %v593
  %608 = vrot.lane.b32.xlu0 %v605, 112
  %v609 = vpop.permute.xlu0 %608
  %v611 = vmul.f32 %v606, %v609
  %v612 = vmul.f32 %v593, %v511
  %v613 = vadd.f32 %v611, %v612
  %615 = vrot.lane.b32.xlu0 %v613, 112
  %v616 = vpop.permute.xlu0 %615
  %v617 = vsel %vm205, %v616, 0
  %619 = vmatprep.subr.mxu0 0.0
  %620 = vmatpush1.msra.mxu0 %v174
  %621 = vmatprep.subr.mxu0 0.0
  %622 = vmatpush1.msra.mxu0 %v175
  %623 = vmatprep.subr.mxu0 0.0
  %624 = vmatpush1.msra.mxu0 0.0
  %625 = vmatprep.subr.mxu0 0.0
  %626 = vmatpush1.msra.mxu0 0.0
  %627 = vmatprep.subr.mxu0 0.0
  %628 = vmatpush1.msra.mxu0 0.0
  %629 = vmatprep.subr.mxu0 0.0
  %630 = vmatpush1.msra.mxu0 0.0
  %631 = vmatprep.subr.mxu0 0.0
  %632 = vmatpush1.msra.mxu0 0.0
  %633 = vmatprep.subr.mxu0 0.0
  %634 = vmatpush1.msra.mxu0 0.0
  %635 = vmatprep.subr.mxu0 0.0
  %636 = vmatpush1.msra.mxu0 0.0
  %637 = vmatprep.subr.mxu0 0.0
  %638 = vmatpush1.msra.mxu0 0.0
  %639 = vmatprep.subr.mxu0 0.0
  %640 = vmatpush1.msra.mxu0 0.0
  %641 = vmatprep.subr.mxu0 0.0
  %642 = vmatpush1.msra.mxu0 0.0
  %643 = vmatprep.subr.mxu0 0.0
  %644 = vmatpush1.msra.mxu0 0.0
  %645 = vmatprep.subr.mxu0 0.0
  %646 = vmatpush1.msra.mxu0 0.0
  %647 = vmatprep.subr.mxu0 0.0
  %648 = vmatpush1.msra.mxu0 0.0
  %649 = vmatprep.subr.mxu0 0.0
  %650 = vmatpush1.msra.mxu0 0.0
  %651 = vmatprep.subr.mxu0 0.0
  %652 = vmatpush1.msra.mxu0 0.0
  %653 = vmatprep.subr.mxu0 0.0
  %654 = vmatpush1.msra.mxu0 0.0
  %655 = vmatprep.subr.mxu0 0.0
  %656 = vmatpush1.msra.mxu0 0.0
  %657 = vmatprep.subr.mxu0 0.0
  %658 = vmatpush1.msra.mxu0 0.0
  %659 = vmatprep.subr.mxu0 0.0
  %660 = vmatpush1.msra.mxu0 0.0
  %661 = vmatprep.subr.mxu0 0.0
  %662 = vmatpush1.msra.mxu0 0.0
  %663 = vmatprep.subr.mxu0 0.0
  %664 = vmatpush1.msra.mxu0 0.0
  %665 = vmatprep.subr.mxu0 0.0
  %666 = vmatpush1.msra.mxu0 0.0
  %667 = vmatprep.subr.mxu0 0.0
  %668 = vmatpush1.msra.mxu0 0.0
  %669 = vmatprep.subr.mxu0 0.0
  %670 = vmatpush1.msra.mxu0 0.0
  %671 = vmatprep.subr.mxu0 0.0
  %672 = vmatpush1.msra.mxu0 0.0
  %673 = vmatprep.subr.mxu0 0.0
  %674 = vmatpush1.msra.mxu0 0.0
  %675 = vmatprep.subr.mxu0 0.0
  %676 = vmatpush1.msra.mxu0 0.0
  %677 = vmatprep.subr.mxu0 0.0
  %678 = vmatpush1.msra.mxu0 0.0
  %679 = vmatprep.subr.mxu0 0.0
  %680 = vmatpush1.msra.mxu0 0.0
  %681 = vmatprep.subr.mxu0 0.0
  %682 = vmatpush1.msra.mxu0 0.0
  %683 = vmatprep.mubr.f32.mxu0 0.0
  %684 = vmatmul.mubr.f32.gmra.mrb[0].mxu0 %v617
  %v685 = vpop.f32.mrb[0].mxu0
  %v686 = vadd.f32 0.0, %v685
  %v687 = vpop.f32.mrb[0].mxu0
  %688 = vdwg.mxu0
  %v689 = vadd.f32 %v171, %v686
  %v690 = vxor.u32 %v689, 2147483648
  %v691 = vmul.f32 %v690, 1.442695
  %v692 = vpow.pop %v691
  %v693 = vadd.f32 %v692, 1.0
  %v694 = vrcp.pop %v693
  %v695 = vmul.f32 1.0, %v694
  %v696 = vadd.f32 %v686, %v286
  %698 = vrot.lane.b32.xlu0 %v696, 96
  %v699 = vpop.permute.xlu0 %698
  %v701 = vmul.f32 %v695, %v699
  %703 = vrot.lane.b32.xlu0 %v701, 32
  %v704 = vpop.permute.xlu0 %703
  %v706 = vadd.f32 %v171, %v704
  %v707 = vtanh.pop %v706
  %v708 = vsub.f32 1.0, %v695
  %710 = vrot.lane.b32.xlu0 %v707, 112
  %v711 = vpop.permute.xlu0 %710
  %v713 = vmul.f32 %v708, %v711
  %v714 = vmul.f32 %v695, %v613
  %v715 = vadd.f32 %v713, %v714
  %717 = vrot.lane.b32.xlu0 %v715, 112
  %v718 = vpop.permute.xlu0 %717
  %720 = vst.msk [vmem:[%s14] sm:$0xff] %vm205, %v718
  %v721 = vld [vmem:[%s5] sm:$0xff]
  %v722 = vld [vmem:[%s5 + $0x8] sm:$0xff]
  %v723 = vld [vmem:[%s7] sm:$0x1]
  %v725 = vlaneseq
  %v726 = vshrl.u32 %v725, 7
  %v727 = vsub.s32 0, %v726
  %v728 = vrot.slane %v723, %v727
  %v730 = vsel %vm205, %v718, 0
  %732 = vmatprep.subr.mxu0 0.0
  %733 = vmatpush1.msra.mxu0 %v721
  %734 = vmatprep.subr.mxu0 0.0
  %735 = vmatpush1.msra.mxu0 %v722
  %736 = vmatprep.subr.mxu0 0.0
  %737 = vmatpush1.msra.mxu0 0.0
  %738 = vmatprep.subr.mxu0 0.0
  %739 = vmatpush1.msra.mxu0 0.0
  %740 = vmatprep.subr.mxu0 0.0
  %741 = vmatpush1.msra.mxu0 0.0
  %742 = vmatprep.subr.mxu0 0.0
  %743 = vmatpush1.msra.mxu0 0.0
  %744 = vmatprep.subr.mxu0 0.0
  %745 = vmatpush1.msra.mxu0 0.0
  %746 = vmatprep.subr.mxu0 0.0
  %747 = vmatpush1.msra.mxu0 0.0
  %748 = vmatprep.subr.mxu0 0.0
  %749 = vmatpush1.msra.mxu0 0.0
  %750 = vmatprep.subr.mxu0 0.0
  %751 = vmatpush1.msra.mxu0 0.0
  %752 = vmatprep.subr.mxu0 0.0
  %753 = vmatpush1.msra.mxu0 0.0
  %754 = vmatprep.subr.mxu0 0.0
  %755 = vmatpush1.msra.mxu0 0.0
  %756 = vmatprep.subr.mxu0 0.0
  %757 = vmatpush1.msra.mxu0 0.0
  %758 = vmatprep.subr.mxu0 0.0
  %759 = vmatpush1.msra.mxu0 0.0
  %760 = vmatprep.subr.mxu0 0.0
  %761 = vmatpush1.msra.mxu0 0.0
  %762 = vmatprep.subr.mxu0 0.0
  %763 = vmatpush1.msra.mxu0 0.0
  %764 = vmatprep.subr.mxu0 0.0
  %765 = vmatpush1.msra.mxu0 0.0
  %766 = vmatprep.subr.mxu0 0.0
  %767 = vmatpush1.msra.mxu0 0.0
  %768 = vmatprep.subr.mxu0 0.0
  %769 = vmatpush1.msra.mxu0 0.0
  %770 = vmatprep.subr.mxu0 0.0
  %771 = vmatpush1.msra.mxu0 0.0
  %772 = vmatprep.subr.mxu0 0.0
  %773 = vmatpush1.msra.mxu0 0.0
  %774 = vmatprep.subr.mxu0 0.0
  %775 = vmatpush1.msra.mxu0 0.0
  %776 = vmatprep.subr.mxu0 0.0
  %777 = vmatpush1.msra.mxu0 0.0
  %778 = vmatprep.subr.mxu0 0.0
  %779 = vmatpush1.msra.mxu0 0.0
  %780 = vmatprep.subr.mxu0 0.0
  %781 = vmatpush1.msra.mxu0 0.0
  %782 = vmatprep.subr.mxu0 0.0
  %783 = vmatpush1.msra.mxu0 0.0
  %784 = vmatprep.subr.mxu0 0.0
  %785 = vmatpush1.msra.mxu0 0.0
  %786 = vmatprep.subr.mxu0 0.0
  %787 = vmatpush1.msra.mxu0 0.0
  %788 = vmatprep.subr.mxu0 0.0
  %789 = vmatpush1.msra.mxu0 0.0
  %790 = vmatprep.subr.mxu0 0.0
  %791 = vmatpush1.msra.mxu0 0.0
  %792 = vmatprep.subr.mxu0 0.0
  %793 = vmatpush1.msra.mxu0 0.0
  %794 = vmatprep.subr.mxu0 0.0
  %795 = vmatpush1.msra.mxu0 0.0
  %796 = vmatprep.mubr.f32.mxu0 0.0
  %797 = vmatmul.mubr.f32.gmra.mrb[0].mxu0 %v206
  %v798 = vpop.f32.mrb[0].mxu0
  %v799 = vadd.f32 %v728, %v798
  %v800 = vpop.f32.mrb[0].mxu0
  %801 = vmatprep.mubr.f32.mxu0 0.0
  %802 = vmatmul.mubr.f32.gmra.mrb[0].mxu0 %v311
  %v803 = vpop.f32.mrb[0].mxu0
  %v804 = vadd.f32 %v728, %v803
  %v805 = vpop.f32.mrb[0].mxu0
  %806 = vmatprep.mubr.f32.mxu0 0.0
  %807 = vmatmul.mubr.f32.gmra.mrb[0].mxu0 %v413
  %v808 = vpop.f32.mrb[0].mxu0
  %v809 = vadd.f32 %v728, %v808
  %v810 = vpop.f32.mrb[0].mxu0
  %811 = vmatprep.mubr.f32.mxu0 0.0
  %812 = vmatmul.mubr.f32.gmra.mrb[0].mxu0 %v515
  %v813 = vpop.f32.mrb[0].mxu0
  %v814 = vadd.f32 %v728, %v813
  %v815 = vpop.f32.mrb[0].mxu0
  %816 = vmatprep.mubr.f32.mxu0 0.0
  %817 = vmatmul.mubr.f32.gmra.mrb[0].mxu0 %v617
  %v818 = vpop.f32.mrb[0].mxu0
  %v819 = vadd.f32 %v728, %v818
  %v820 = vpop.f32.mrb[0].mxu0
  %821 = vmatprep.mubr.f32.mxu0 0.0
  %822 = vmatmul.mubr.f32.gmra.mrb[0].mxu0 %v730
  %v823 = vpop.f32.mrb[0].mxu0
  %v824 = vadd.f32 %v728, %v823
  %v825 = vpop.f32.mrb[0].mxu0
  %826 = vdwg.mxu0
  %v827 = vld [vmem:[%s6] sm:$0xff]
  %v828 = vld [vmem:[%s6 + $0x8] sm:$0xff]
  %v829 = vld [vmem:[%s8] sm:$0x1]
  %v830 = vxor.u32 %v799, 2147483648
  %v831 = vmul.f32 %v830, 1.442695
  %v832 = vpow.pop %v831
  %v833 = vadd.f32 %v832, 1.0
  %v834 = vrcp.pop %v833
  %v835 = vmul.f32 1.0, %v834
  %v837 = vlaneseq
  %v838 = vshrl.u32 %v837, 7
  %v839 = vsub.s32 0, %v838
  %v840 = vrot.slane %v829, %v839
  %v842 = vmul.f32 %v835, %v840
  %844 = vrot.lane.b32.xlu0 %v842, 32
  %v845 = vpop.permute.xlu0 %844
  %v847 = vadd.f32 %v799, %v845
  %v848 = vtanh.pop %v847
  %v849 = vsub.f32 1.0, %v835
  %851 = vrot.lane.b32.xlu0 %v848, 112
  %v852 = vpop.permute.xlu0 %851
  %v854 = vmul.f32 %v849, %v852
  %856 = vrot.lane.b32.xlu0 %v854, 112
  %v857 = vpop.permute.xlu0 %856
  %v858 = vsel %vm205, %v857, 0
  %860 = vmatprep.subr.mxu0 0.0
  %861 = vmatpush1.msra.mxu0 %v827
  %862 = vmatprep.subr.mxu0 0.0
  %863 = vmatpush1.msra.mxu0 %v828
  %864 = vmatprep.subr.mxu0 0.0
  %865 = vmatpush1.msra.mxu0 0.0
  %866 = vmatprep.subr.mxu0 0.0
  %867 = vmatpush1.msra.mxu0 0.0
  %868 = vmatprep.subr.mxu0 0.0
  %869 = vmatpush1.msra.mxu0 0.0
  %870 = vmatprep.subr.mxu0 0.0
  %871 = vmatpush1.msra.mxu0 0.0
  %872 = vmatprep.subr.mxu0 0.0
  %873 = vmatpush1.msra.mxu0 0.0
  %874 = vmatprep.subr.mxu0 0.0
  %875 = vmatpush1.msra.mxu0 0.0
  %876 = vmatprep.subr.mxu0 0.0
  %877 = vmatpush1.msra.mxu0 0.0
  %878 = vmatprep.subr.mxu0 0.0
  %879 = vmatpush1.msra.mxu0 0.0
  %880 = vmatprep.subr.mxu0 0.0
  %881 = vmatpush1.msra.mxu0 0.0
  %882 = vmatprep.subr.mxu0 0.0
  %883 = vmatpush1.msra.mxu0 0.0
  %884 = vmatprep.subr.mxu0 0.0
  %885 = vmatpush1.msra.mxu0 0.0
  %886 = vmatprep.subr.mxu0 0.0
  %887 = vmatpush1.msra.mxu0 0.0
  %888 = vmatprep.subr.mxu0 0.0
  %889 = vmatpush1.msra.mxu0 0.0
  %890 = vmatprep.subr.mxu0 0.0
  %891 = vmatpush1.msra.mxu0 0.0
  %892 = vmatprep.subr.mxu0 0.0
  %893 = vmatpush1.msra.mxu0 0.0
  %894 = vmatprep.subr.mxu0 0.0
  %895 = vmatpush1.msra.mxu0 0.0
  %896 = vmatprep.subr.mxu0 0.0
  %897 = vmatpush1.msra.mxu0 0.0
  %898 = vmatprep.subr.mxu0 0.0
  %899 = vmatpush1.msra.mxu0 0.0
  %900 = vmatprep.subr.mxu0 0.0
  %901 = vmatpush1.msra.mxu0 0.0
  %902 = vmatprep.subr.mxu0 0.0
  %903 = vmatpush1.msra.mxu0 0.0
  %904 = vmatprep.subr.mxu0 0.0
  %905 = vmatpush1.msra.mxu0 0.0
  %906 = vmatprep.subr.mxu0 0.0
  %907 = vmatpush1.msra.mxu0 0.0
  %908 = vmatprep.subr.mxu0 0.0
  %909 = vmatpush1.msra.mxu0 0.0
  %910 = vmatprep.subr.mxu0 0.0
  %911 = vmatpush1.msra.mxu0 0.0
  %912 = vmatprep.subr.mxu0 0.0
  %913 = vmatpush1.msra.mxu0 0.0
  %914 = vmatprep.subr.mxu0 0.0
  %915 = vmatpush1.msra.mxu0 0.0
  %916 = vmatprep.subr.mxu0 0.0
  %917 = vmatpush1.msra.mxu0 0.0
  %918 = vmatprep.subr.mxu0 0.0
  %919 = vmatpush1.msra.mxu0 0.0
  %920 = vmatprep.subr.mxu0 0.0
  %921 = vmatpush1.msra.mxu0 0.0
  %922 = vmatprep.subr.mxu0 0.0
  %923 = vmatpush1.msra.mxu0 0.0
  %924 = vmatprep.mubr.f32.mxu0 0.0
  %925 = vmatmul.mubr.f32.gmra.mrb[0].mxu0 %v858
  %v926 = vpop.f32.mrb[0].mxu0
  %v927 = vadd.f32 0.0, %v926
  %v928 = vpop.f32.mrb[0].mxu0
  %929 = vdwg.mxu0
  %v930 = vadd.f32 %v804, %v927
  %v931 = vxor.u32 %v930, 2147483648
  %v932 = vmul.f32 %v931, 1.442695
  %v933 = vpow.pop %v932
  %v934 = vadd.f32 %v933, 1.0
  %v935 = vrcp.pop %v934
  %v936 = vmul.f32 1.0, %v935
  %937 = vrot.lane.b32.xlu0 %v840, 32
  %v938 = vpop.permute.xlu0 %937
  %v940 = vadd.f32 %v927, %v938
  %942 = vrot.lane.b32.xlu0 %v940, 96
  %v943 = vpop.permute.xlu0 %942
  %v945 = vmul.f32 %v936, %v943
  %947 = vrot.lane.b32.xlu0 %v945, 32
  %v948 = vpop.permute.xlu0 %947
  %v950 = vadd.f32 %v804, %v948
  %v951 = vtanh.pop %v950
  %v952 = vsub.f32 1.0, %v936
  %954 = vrot.lane.b32.xlu0 %v951, 112
  %v955 = vpop.permute.xlu0 %954
  %v957 = vmul.f32 %v952, %v955
  %v958 = vmul.f32 %v936, %v854
  %v959 = vadd.f32 %v957, %v958
  %961 = vrot.lane.b32.xlu0 %v959, 112
  %v962 = vpop.permute.xlu0 %961
  %v963 = vsel %vm205, %v962, 0
  %965 = vmatprep.subr.mxu0 0.0
  %966 = vmatpush1.msra.mxu0 %v827
  %967 = vmatprep.subr.mxu0 0.0
  %968 = vmatpush1.msra.mxu0 %v828
  %969 = vmatprep.subr.mxu0 0.0
  %970 = vmatpush1.msra.mxu0 0.0
  %971 = vmatprep.subr.mxu0 0.0
  %972 = vmatpush1.msra.mxu0 0.0
  %973 = vmatprep.subr.mxu0 0.0
  %974 = vmatpush1.msra.mxu0 0.0
  %975 = vmatprep.subr.mxu0 0.0
  %976 = vmatpush1.msra.mxu0 0.0
  %977 = vmatprep.subr.mxu0 0.0
  %978 = vmatpush1.msra.mxu0 0.0
  %979 = vmatprep.subr.mxu0 0.0
  %980 = vmatpush1.msra.mxu0 0.0
  %981 = vmatprep.subr.mxu0 0.0
  %982 = vmatpush1.msra.mxu0 0.0
  %983 = vmatprep.subr.mxu0 0.0
  %984 = vmatpush1.msra.mxu0 0.0
  %985 = vmatprep.subr.mxu0 0.0
  %986 = vmatpush1.msra.mxu0 0.0
  %987 = vmatprep.subr.mxu0 0.0
  %988 = vmatpush1.msra.mxu0 0.0
  %989 = vmatprep.subr.mxu0 0.0
  %990 = vmatpush1.msra.mxu0 0.0
  %991 = vmatprep.subr.mxu0 0.0
  %992 = vmatpush1.msra.mxu0 0.0
  %993 = vmatprep.subr.mxu0 0.0
  %994 = vmatpush1.msra.mxu0 0.0
  %995 = vmatprep.subr.mxu0 0.0
  %996 = vmatpush1.msra.mxu0 0.0
  %997 = vmatprep.subr.mxu0 0.0
  %998 = vmatpush1.msra.mxu0 0.0
  %999 = vmatprep.subr.mxu0 0.0
  %1000 = vmatpush1.msra.mxu0 0.0
  %1001 = vmatprep.subr.mxu0 0.0
  %1002 = vmatpush1.msra.mxu0 0.0
  %1003 = vmatprep.subr.mxu0 0.0
  %1004 = vmatpush1.msra.mxu0 0.0
  %1005 = vmatprep.subr.mxu0 0.0
  %1006 = vmatpush1.msra.mxu0 0.0
  %1007 = vmatprep.subr.mxu0 0.0
  %1008 = vmatpush1.msra.mxu0 0.0
  %1009 = vmatprep.subr.mxu0 0.0
  %1010 = vmatpush1.msra.mxu0 0.0
  %1011 = vmatprep.subr.mxu0 0.0
  %1012 = vmatpush1.msra.mxu0 0.0
  %1013 = vmatprep.subr.mxu0 0.0
  %1014 = vmatpush1.msra.mxu0 0.0
  %1015 = vmatprep.subr.mxu0 0.0
  %1016 = vmatpush1.msra.mxu0 0.0
  %1017 = vmatprep.subr.mxu0 0.0
  %1018 = vmatpush1.msra.mxu0 0.0
  %1019 = vmatprep.subr.mxu0 0.0
  %1020 = vmatpush1.msra.mxu0 0.0
  %1021 = vmatprep.subr.mxu0 0.0
  %1022 = vmatpush1.msra.mxu0 0.0
  %1023 = vmatprep.subr.mxu0 0.0
  %1024 = vmatpush1.msra.mxu0 0.0
  %1025 = vmatprep.subr.mxu0 0.0
  %1026 = vmatpush1.msra.mxu0 0.0
  %1027 = vmatprep.subr.mxu0 0.0
  %1028 = vmatpush1.msra.mxu0 0.0
  %1029 = vmatprep.mubr.f32.mxu0 0.0
  %1030 = vmatmul.mubr.f32.gmra.mrb[0].mxu0 %v963
  %v1031 = vpop.f32.mrb[0].mxu0
  %v1032 = vadd.f32 0.0, %v1031
  %v1033 = vpop.f32.mrb[0].mxu0
  %1034 = vdwg.mxu0
  %v1035 = vadd.f32 %v809, %v1032
  %v1036 = vxor.u32 %v1035, 2147483648
  %v1037 = vmul.f32 %v1036, 1.442695
  %v1038 = vpow.pop %v1037
  %v1039 = vadd.f32 %v1038, 1.0
  %v1040 = vrcp.pop %v1039
  %v1041 = vmul.f32 1.0, %v1040
  %v1042 = vadd.f32 %v1032, %v938
  %1044 = vrot.lane.b32.xlu0 %v1042, 96
  %v1045 = vpop.permute.xlu0 %1044
  %v1047 = vmul.f32 %v1041, %v1045
  %1049 = vrot.lane.b32.xlu0 %v1047, 32
  %v1050 = vpop.permute.xlu0 %1049
  %v1052 = vadd.f32 %v809, %v1050
  %v1053 = vtanh.pop %v1052
  %v1054 = vsub.f32 1.0, %v1041
  %1056 = vrot.lane.b32.xlu0 %v1053, 112
  %v1057 = vpop.permute.xlu0 %1056
  %v1059 = vmul.f32 %v1054, %v1057
  %v1060 = vmul.f32 %v1041, %v959
  %v1061 = vadd.f32 %v1059, %v1060
  %1063 = vrot.lane.b32.xlu0 %v1061, 112
  %v1064 = vpop.permute.xlu0 %1063
  %v1065 = vsel %vm205, %v1064, 0
  %1067 = vmatprep.subr.mxu0 0.0
  %1068 = vmatpush1.msra.mxu0 %v827
  %1069 = vmatprep.subr.mxu0 0.0
  %1070 = vmatpush1.msra.mxu0 %v828
  %1071 = vmatprep.subr.mxu0 0.0
  %1072 = vmatpush1.msra.mxu0 0.0
  %1073 = vmatprep.subr.mxu0 0.0
  %1074 = vmatpush1.msra.mxu0 0.0
  %1075 = vmatprep.subr.mxu0 0.0
  %1076 = vmatpush1.msra.mxu0 0.0
  %1077 = vmatprep.subr.mxu0 0.0
  %1078 = vmatpush1.msra.mxu0 0.0
  %1079 = vmatprep.subr.mxu0 0.0
  %1080 = vmatpush1.msra.mxu0 0.0
  %1081 = vmatprep.subr.mxu0 0.0
  %1082 = vmatpush1.msra.mxu0 0.0
  %1083 = vmatprep.subr.mxu0 0.0
  %1084 = vmatpush1.msra.mxu0 0.0
  %1085 = vmatprep.subr.mxu0 0.0
  %1086 = vmatpush1.msra.mxu0 0.0
  %1087 = vmatprep.subr.mxu0 0.0
  %1088 = vmatpush1.msra.mxu0 0.0
  %1089 = vmatprep.subr.mxu0 0.0
  %1090 = vmatpush1.msra.mxu0 0.0
  %1091 = vmatprep.subr.mxu0 0.0
  %1092 = vmatpush1.msra.mxu0 0.0
  %1093 = vmatprep.subr.mxu0 0.0
  %1094 = vmatpush1.msra.mxu0 0.0
  %1095 = vmatprep.subr.mxu0 0.0
  %1096 = vmatpush1.msra.mxu0 0.0
  %1097 = vmatprep.subr.mxu0 0.0
  %1098 = vmatpush1.msra.mxu0 0.0
  %1099 = vmatprep.subr.mxu0 0.0
  %1100 = vmatpush1.msra.mxu0 0.0
  %1101 = vmatprep.subr.mxu0 0.0
  %1102 = vmatpush1.msra.mxu0 0.0
  %1103 = vmatprep.subr.mxu0 0.0
  %1104 = vmatpush1.msra.mxu0 0.0
  %1105 = vmatprep.subr.mxu0 0.0
  %1106 = vmatpush1.msra.mxu0 0.0
  %1107 = vmatprep.subr.mxu0 0.0
  %1108 = vmatpush1.msra.mxu0 0.0
  %1109 = vmatprep.subr.mxu0 0.0
  %1110 = vmatpush1.msra.mxu0 0.0
  %1111 = vmatprep.subr.mxu0 0.0
  %1112 = vmatpush1.msra.mxu0 0.0
  %1113 = vmatprep.subr.mxu0 0.0
  %1114 = vmatpush1.msra.mxu0 0.0
  %1115 = vmatprep.subr.mxu0 0.0
  %1116 = vmatpush1.msra.mxu0 0.0
  %1117 = vmatprep.subr.mxu0 0.0
  %1118 = vmatpush1.msra.mxu0 0.0
  %1119 = vmatprep.subr.mxu0 0.0
  %1120 = vmatpush1.msra.mxu0 0.0
  %1121 = vmatprep.subr.mxu0 0.0
  %1122 = vmatpush1.msra.mxu0 0.0
  %1123 = vmatprep.subr.mxu0 0.0
  %1124 = vmatpush1.msra.mxu0 0.0
  %1125 = vmatprep.subr.mxu0 0.0
  %1126 = vmatpush1.msra.mxu0 0.0
  %1127 = vmatprep.subr.mxu0 0.0
  %1128 = vmatpush1.msra.mxu0 0.0
  %1129 = vmatprep.subr.mxu0 0.0
  %1130 = vmatpush1.msra.mxu0 0.0
  %1131 = vmatprep.mubr.f32.mxu0 0.0
  %1132 = vmatmul.mubr.f32.gmra.mrb[0].mxu0 %v1065
  %v1133 = vpop.f32.mrb[0].mxu0
  %v1134 = vadd.f32 0.0, %v1133
  %v1135 = vpop.f32.mrb[0].mxu0
  %1136 = vdwg.mxu0
  %v1137 = vadd.f32 %v814, %v1134
  %v1138 = vxor.u32 %v1137, 2147483648
  %v1139 = vmul.f32 %v1138, 1.442695
  %v1140 = vpow.pop %v1139
  %v1141 = vadd.f32 %v1140, 1.0
  %v1142 = vrcp.pop %v1141
  %v1143 = vmul.f32 1.0, %v1142
  %v1144 = vadd.f32 %v1134, %v938
  %1146 = vrot.lane.b32.xlu0 %v1144, 96
  %v1147 = vpop.permute.xlu0 %1146
  %v1149 = vmul.f32 %v1143, %v1147
  %1151 = vrot.lane.b32.xlu0 %v1149, 32
  %v1152 = vpop.permute.xlu0 %1151
  %v1154 = vadd.f32 %v814, %v1152
  %v1155 = vtanh.pop %v1154
  %v1156 = vsub.f32 1.0, %v1143
  %1158 = vrot.lane.b32.xlu0 %v1155, 112
  %v1159 = vpop.permute.xlu0 %1158
  %v1161 = vmul.f32 %v1156, %v1159
  %v1162 = vmul.f32 %v1143, %v1061
  %v1163 = vadd.f32 %v1161, %v1162
  %1165 = vrot.lane.b32.xlu0 %v1163, 112
  %v1166 = vpop.permute.xlu0 %1165
  %v1167 = vsel %vm205, %v1166, 0
  %1169 = vmatprep.subr.mxu0 0.0
  %1170 = vmatpush1.msra.mxu0 %v827
  %1171 = vmatprep.subr.mxu0 0.0
  %1172 = vmatpush1.msra.mxu0 %v828
  %1173 = vmatprep.subr.mxu0 0.0
  %1174 = vmatpush1.msra.mxu0 0.0
  %1175 = vmatprep.subr.mxu0 0.0
  %1176 = vmatpush1.msra.mxu0 0.0
  %1177 = vmatprep.subr.mxu0 0.0
  %1178 = vmatpush1.msra.mxu0 0.0
  %1179 = vmatprep.subr.mxu0 0.0
  %1180 = vmatpush1.msra.mxu0 0.0
  %1181 = vmatprep.subr.mxu0 0.0
  %1182 = vmatpush1.msra.mxu0 0.0
  %1183 = vmatprep.subr.mxu0 0.0
  %1184 = vmatpush1.msra.mxu0 0.0
  %1185 = vmatprep.subr.mxu0 0.0
  %1186 = vmatpush1.msra.mxu0 0.0
  %1187 = vmatprep.subr.mxu0 0.0
  %1188 = vmatpush1.msra.mxu0 0.0
  %1189 = vmatprep.subr.mxu0 0.0
  %1190 = vmatpush1.msra.mxu0 0.0
  %1191 = vmatprep.subr.mxu0 0.0
  %1192 = vmatpush1.msra.mxu0 0.0
  %1193 = vmatprep.subr.mxu0 0.0
  %1194 = vmatpush1.msra.mxu0 0.0
  %1195 = vmatprep.subr.mxu0 0.0
  %1196 = vmatpush1.msra.mxu0 0.0
  %1197 = vmatprep.subr.mxu0 0.0
  %1198 = vmatpush1.msra.mxu0 0.0
  %1199 = vmatprep.subr.mxu0 0.0
  %1200 = vmatpush1.msra.mxu0 0.0
  %1201 = vmatprep.subr.mxu0 0.0
  %1202 = vmatpush1.msra.mxu0 0.0
  %1203 = vmatprep.subr.mxu0 0.0
  %1204 = vmatpush1.msra.mxu0 0.0
  %1205 = vmatprep.subr.mxu0 0.0
  %1206 = vmatpush1.msra.mxu0 0.0
  %1207 = vmatprep.subr.mxu0 0.0
  %1208 = vmatpush1.msra.mxu0 0.0
  %1209 = vmatprep.subr.mxu0 0.0
  %1210 = vmatpush1.msra.mxu0 0.0
  %1211 = vmatprep.subr.mxu0 0.0
  %1212 = vmatpush1.msra.mxu0 0.0
  %1213 = vmatprep.subr.mxu0 0.0
  %1214 = vmatpush1.msra.mxu0 0.0
  %1215 = vmatprep.subr.mxu0 0.0
  %1216 = vmatpush1.msra.mxu0 0.0
  %1217 = vmatprep.subr.mxu0 0.0
  %1218 = vmatpush1.msra.mxu0 0.0
  %1219 = vmatprep.subr.mxu0 0.0
  %1220 = vmatpush1.msra.mxu0 0.0
  %1221 = vmatprep.subr.mxu0 0.0
  %1222 = vmatpush1.msra.mxu0 0.0
  %1223 = vmatprep.subr.mxu0 0.0
  %1224 = vmatpush1.msra.mxu0 0.0
  %1225 = vmatprep.subr.mxu0 0.0
  %1226 = vmatpush1.msra.mxu0 0.0
  %1227 = vmatprep.subr.mxu0 0.0
  %1228 = vmatpush1.msra.mxu0 0.0
  %1229 = vmatprep.subr.mxu0 0.0
  %1230 = vmatpush1.msra.mxu0 0.0
  %1231 = vmatprep.subr.mxu0 0.0
  %1232 = vmatpush1.msra.mxu0 0.0
  %1233 = vmatprep.mubr.f32.mxu0 0.0
  %1234 = vmatmul.mubr.f32.gmra.mrb[0].mxu0 %v1167
  %v1235 = vpop.f32.mrb[0].mxu0
  %v1236 = vadd.f32 0.0, %v1235
  %v1237 = vpop.f32.mrb[0].mxu0
  %1238 = vdwg.mxu0
  %v1239 = vadd.f32 %v819, %v1236
  %v1240 = vxor.u32 %v1239, 2147483648
  %v1241 = vmul.f32 %v1240, 1.442695
  %v1242 = vpow.pop %v1241
  %v1243 = vadd.f32 %v1242, 1.0
  %v1244 = vrcp.pop %v1243
  %v1245 = vmul.f32 1.0, %v1244
  %v1246 = vadd.f32 %v1236, %v938
  %1248 = vrot.lane.b32.xlu0 %v1246, 96
  %v1249 = vpop.permute.xlu0 %1248
  %v1251 = vmul.f32 %v1245, %v1249
  %1253 = vrot.lane.b32.xlu0 %v1251, 32
  %v1254 = vpop.permute.xlu0 %1253
  %v1256 = vadd.f32 %v819, %v1254
  %v1257 = vtanh.pop %v1256
  %v1258 = vsub.f32 1.0, %v1245
  %1260 = vrot.lane.b32.xlu0 %v1257, 112
  %v1261 = vpop.permute.xlu0 %1260
  %v1263 = vmul.f32 %v1258, %v1261
  %v1264 = vmul.f32 %v1245, %v1163
  %v1265 = vadd.f32 %v1263, %v1264
  %1267 = vrot.lane.b32.xlu0 %v1265, 112
  %v1268 = vpop.permute.xlu0 %1267
  %v1269 = vsel %vm205, %v1268, 0
  %1271 = vmatprep.subr.mxu0 0.0
  %1272 = vmatpush1.msra.mxu0 %v827
  %1273 = vmatprep.subr.mxu0 0.0
  %1274 = vmatpush1.msra.mxu0 %v828
  %1275 = vmatprep.subr.mxu0 0.0
  %1276 = vmatpush1.msra.mxu0 0.0
  %1277 = vmatprep.subr.mxu0 0.0
  %1278 = vmatpush1.msra.mxu0 0.0
  %1279 = vmatprep.subr.mxu0 0.0
  %1280 = vmatpush1.msra.mxu0 0.0
  %1281 = vmatprep.subr.mxu0 0.0
  %1282 = vmatpush1.msra.mxu0 0.0
  %1283 = vmatprep.subr.mxu0 0.0
  %1284 = vmatpush1.msra.mxu0 0.0
  %1285 = vmatprep.subr.mxu0 0.0
  %1286 = vmatpush1.msra.mxu0 0.0
  %1287 = vmatprep.subr.mxu0 0.0
  %1288 = vmatpush1.msra.mxu0 0.0
  %1289 = vmatprep.subr.mxu0 0.0
  %1290 = vmatpush1.msra.mxu0 0.0
  %1291 = vmatprep.subr.mxu0 0.0
  %1292 = vmatpush1.msra.mxu0 0.0
  %1293 = vmatprep.subr.mxu0 0.0
  %1294 = vmatpush1.msra.mxu0 0.0
  %1295 = vmatprep.subr.mxu0 0.0
  %1296 = vmatpush1.msra.mxu0 0.0
  %1297 = vmatprep.subr.mxu0 0.0
  %1298 = vmatpush1.msra.mxu0 0.0
  %1299 = vmatprep.subr.mxu0 0.0
  %1300 = vmatpush1.msra.mxu0 0.0
  %1301 = vmatprep.subr.mxu0 0.0
  %1302 = vmatpush1.msra.mxu0 0.0
  %1303 = vmatprep.subr.mxu0 0.0
  %1304 = vmatpush1.msra.mxu0 0.0
  %1305 = vmatprep.subr.mxu0 0.0
  %1306 = vmatpush1.msra.mxu0 0.0
  %1307 = vmatprep.subr.mxu0 0.0
  %1308 = vmatpush1.msra.mxu0 0.0
  %1309 = vmatprep.subr.mxu0 0.0
  %1310 = vmatpush1.msra.mxu0 0.0
  %1311 = vmatprep.subr.mxu0 0.0
  %1312 = vmatpush1.msra.mxu0 0.0
  %1313 = vmatprep.subr.mxu0 0.0
  %1314 = vmatpush1.msra.mxu0 0.0
  %1315 = vmatprep.subr.mxu0 0.0
  %1316 = vmatpush1.msra.mxu0 0.0
  %1317 = vmatprep.subr.mxu0 0.0
  %1318 = vmatpush1.msra.mxu0 0.0
  %1319 = vmatprep.subr.mxu0 0.0
  %1320 = vmatpush1.msra.mxu0 0.0
  %1321 = vmatprep.subr.mxu0 0.0
  %1322 = vmatpush1.msra.mxu0 0.0
  %1323 = vmatprep.subr.mxu0 0.0
  %1324 = vmatpush1.msra.mxu0 0.0
  %1325 = vmatprep.subr.mxu0 0.0
  %1326 = vmatpush1.msra.mxu0 0.0
  %1327 = vmatprep.subr.mxu0 0.0
  %1328 = vmatpush1.msra.mxu0 0.0
  %1329 = vmatprep.subr.mxu0 0.0
  %1330 = vmatpush1.msra.mxu0 0.0
  %1331 = vmatprep.subr.mxu0 0.0
  %1332 = vmatpush1.msra.mxu0 0.0
  %1333 = vmatprep.subr.mxu0 0.0
  %1334 = vmatpush1.msra.mxu0 0.0
  %1335 = vmatprep.mubr.f32.mxu0 0.0
  %1336 = vmatmul.mubr.f32.gmra.mrb[0].mxu0 %v1269
  %v1337 = vpop.f32.mrb[0].mxu0
  %v1338 = vadd.f32 0.0, %v1337
  %v1339 = vpop.f32.mrb[0].mxu0
  %1340 = vdwg.mxu0
  %v1341 = vadd.f32 %v824, %v1338
  %v1342 = vxor.u32 %v1341, 2147483648
  %v1343 = vmul.f32 %v1342, 1.442695
  %v1344 = vpow.pop %v1343
  %v1345 = vadd.f32 %v1344, 1.0
  %v1346 = vrcp.pop %v1345
  %v1347 = vmul.f32 1.0, %v1346
  %v1348 = vadd.f32 %v1338, %v938
  %1350 = vrot.lane.b32.xlu0 %v1348, 96
  %v1351 = vpop.permute.xlu0 %1350
  %v1353 = vmul.f32 %v1347, %v1351
  %1355 = vrot.lane.b32.xlu0 %v1353, 32
  %v1356 = vpop.permute.xlu0 %1355
  %v1358 = vadd.f32 %v824, %v1356
  %v1359 = vtanh.pop %v1358
  %v1360 = vsub.f32 1.0, %v1347
  %1362 = vrot.lane.b32.xlu0 %v1359, 112
  %v1363 = vpop.permute.xlu0 %1362
  %v1365 = vmul.f32 %v1360, %v1363
  %v1366 = vmul.f32 %v1347, %v1265
  %v1367 = vadd.f32 %v1365, %v1366
  %1369 = vrot.lane.b32.xlu0 %v1367, 112
  %v1370 = vpop.permute.xlu0 %1369
  %s1372 = scalar_lea.vmem %s14, 8
  %1373 = vst.msk [vmem:[%s1372] sm:$0xff] %vm205, %v1370
  %v1374 = vrot.slane %v959, 7
  %v1376 = vrot.slane %v1061, 6
  %v1378 = vrot.slane %v1163, 5
  %v1380 = vrot.slane %v1265, 4
  %v1382 = vrot.slane %v1367, 3
  %vm1384 = vcmask 1040384
  %v1385 = vsel %vm1384, %v854, %v1374
  %vm1386 = vcmask 1041408
  %v1387 = vsel %vm1386, %v1385, %v1376
  %vm1388 = vcmask 1042432
  %v1389 = vsel %vm1388, %v1387, %v1378
  %vm1390 = vcmask 1043456
  %v1391 = vsel %vm1390, %v1389, %v1380
  %vm1392 = vcmask 1044480
  %v1393 = vsel %vm1392, %v1391, %v1382
  %v1394 = vrot.slane %v854, 1
  %v1396 = vrot.slane %v1061, 7
  %v1398 = vrot.slane %v1163, 6
  %v1400 = vrot.slane %v1265, 5
  %v1402 = vrot.slane %v1367, 4
  %v1404 = vsel %vm1384, %v1394, %v959
  %v1405 = vsel %vm1386, %v1404, %v1396
  %v1406 = vsel %vm1388, %v1405, %v1398
  %v1407 = vsel %vm1390, %v1406, %v1400
  %v1408 = vsel %vm1392, %v1407, %v1402
  %v1409 = vrot.slane %v854, 2
  %v1411 = vrot.slane %v959, 1
  %v1413 = vrot.slane %v1163, 7
  %v1415 = vrot.slane %v1265, 6
  %v1417 = vrot.slane %v1367, 5
  %v1419 = vsel %vm1384, %v1409, %v1411
  %v1420 = vsel %vm1386, %v1419, %v1061
  %v1421 = vsel %vm1388, %v1420, %v1413
  %v1422 = vsel %vm1390, %v1421, %v1415
  %v1423 = vsel %vm1392, %v1422, %v1417
  %v1424 = vrot.slane %v854, 3
  %v1426 = vrot.slane %v959, 2
  %v1428 = vrot.slane %v1061, 1
  %v1430 = vrot.slane %v1265, 7
  %v1432 = vrot.slane %v1367, 6
  %v1434 = vsel %vm1384, %v1424, %v1426
  %v1435 = vsel %vm1386, %v1434, %v1428
  %v1436 = vsel %vm1388, %v1435, %v1163
  %v1437 = vsel %vm1390, %v1436, %v1430
  %v1438 = vsel %vm1392, %v1437, %v1432
  %1440 = vrot.lane.b32.xlu0 %v1393, 112
  %v1441 = vpop.permute.xlu0 %1440
  %1444 = vrot.lane.b32.xlu0 %v1423, 16
  %v1445 = vpop.permute.xlu0 %1444
  %1448 = vrot.lane.b32.xlu0 %v1438, 32
  %v1449 = vpop.permute.xlu0 %1448
  %v1451 = vsel %vm205, %v1441, %v1408
  %vm1452 = vcmask 261120
  %v1453 = vsel %vm1452, %v1451, %v1445
  %vm1454 = vcmask 392192
  %v1455 = vsel %vm1454, %v1453, %v1449
  %v1456 = vld [vmem:[%s9] sm:$0xff]
  %v1457 = vld [vmem:[%s9 + $0x8] sm:$0xff]
  %v1458 = vld [vmem:[%s9 + $0x10] sm:$0xff]
  %v1459 = vld [vmem:[%s9 + $0x18] sm:$0xff]
  %v1460 = vld [vmem:[%s9 + $0x20] sm:$0xff]
  %v1461 = vld [vmem:[%s9 + $0x28] sm:$0xff]
  %v1462 = vld [vmem:[%s9 + $0x30] sm:$0xff]
  %v1463 = vld [vmem:[%s9 + $0x38] sm:$0xff]
  %v1464 = vld [vmem:[%s10] sm:$0x1]
  %v1466 = vlaneseq
  %v1467 = vshrl.u32 %v1466, 7
  %v1468 = vsub.s32 0, %v1467
  %v1469 = vrot.slane %v1464, %v1468
  %vm1471 = vcmask 523264
  %v1473 = vsel %vm1471, %v1455, 0
  %1475 = vmatprep.subr.mxu0 0.0
  %1476 = vmatpush1.msra.mxu0 %v1456
  %1477 = vmatprep.subr.mxu0 0.0
  %1478 = vmatpush1.msra.mxu0 %v1457
  %1479 = vmatprep.subr.mxu0 0.0
  %1480 = vmatpush1.msra.mxu0 %v1458
  %1481 = vmatprep.subr.mxu0 0.0
  %1482 = vmatpush1.msra.mxu0 %v1459
  %1483 = vmatprep.subr.mxu0 0.0
  %1484 = vmatpush1.msra.mxu0 %v1460
  %1485 = vmatprep.subr.mxu0 0.0
  %1486 = vmatpush1.msra.mxu0 %v1461
  %1487 = vmatprep.subr.mxu0 0.0
  %1488 = vmatpush1.msra.mxu0 %v1462
  %1489 = vmatprep.subr.mxu0 0.0
  %1490 = vmatpush1.msra.mxu0 %v1463
  %1491 = vmatprep.subr.mxu0 0.0
  %1492 = vmatpush1.msra.mxu0 0.0
  %1493 = vmatprep.subr.mxu0 0.0
  %1494 = vmatpush1.msra.mxu0 0.0
  %1495 = vmatprep.subr.mxu0 0.0
  %1496 = vmatpush1.msra.mxu0 0.0
  %1497 = vmatprep.subr.mxu0 0.0
  %1498 = vmatpush1.msra.mxu0 0.0
  %1499 = vmatprep.subr.mxu0 0.0
  %1500 = vmatpush1.msra.mxu0 0.0
  %1501 = vmatprep.subr.mxu0 0.0
  %1502 = vmatpush1.msra.mxu0 0.0
  %1503 = vmatprep.subr.mxu0 0.0
  %1504 = vmatpush1.msra.mxu0 0.0
  %1505 = vmatprep.subr.mxu0 0.0
  %1506 = vmatpush1.msra.mxu0 0.0
  %1507 = vmatprep.subr.mxu0 0.0
  %1508 = vmatpush1.msra.mxu0 0.0
  %1509 = vmatprep.subr.mxu0 0.0
  %1510 = vmatpush1.msra.mxu0 0.0
  %1511 = vmatprep.subr.mxu0 0.0
  %1512 = vmatpush1.msra.mxu0 0.0
  %1513 = vmatprep.subr.mxu0 0.0
  %1514 = vmatpush1.msra.mxu0 0.0
  %1515 = vmatprep.subr.mxu0 0.0
  %1516 = vmatpush1.msra.mxu0 0.0
  %1517 = vmatprep.subr.mxu0 0.0
  %1518 = vmatpush1.msra.mxu0 0.0
  %1519 = vmatprep.subr.mxu0 0.0
  %1520 = vmatpush1.msra.mxu0 0.0
  %1521 = vmatprep.subr.mxu0 0.0
  %1522 = vmatpush1.msra.mxu0 0.0
  %1523 = vmatprep.subr.mxu0 0.0
  %1524 = vmatpush1.msra.mxu0 0.0
  %1525 = vmatprep.subr.mxu0 0.0
  %1526 = vmatpush1.msra.mxu0 0.0
  %1527 = vmatprep.subr.mxu0 0.0
  %1528 = vmatpush1.msra.mxu0 0.0
  %1529 = vmatprep.subr.mxu0 0.0
  %1530 = vmatpush1.msra.mxu0 0.0
  %1531 = vmatprep.subr.mxu0 0.0
  %1532 = vmatpush1.msra.mxu0 0.0
  %1533 = vmatprep.subr.mxu0 0.0
  %1534 = vmatpush1.msra.mxu0 0.0
  %1535 = vmatprep.subr.mxu0 0.0
  %1536 = vmatpush1.msra.mxu0 0.0
  %1537 = vmatprep.subr.mxu0 0.0
  %1538 = vmatpush1.msra.mxu0 0.0
  %1539 = vmatprep.mubr.f32.mxu0 0.0
  %1540 = vmatmul.mubr.f32.gmra.mrb[0].mxu0 %v1473
  %v1541 = vpop.f32.mrb[0].mxu0
  %v1542 = vadd.f32 %v1469, %v1541
  %v1543 = vpop.f32.mrb[0].mxu0
  %1544 = vdwg.mxu0
  %v1545 = vmax.f32 %v1542, 0.0
  %v1546 = vld [vmem:[%s11] sm:$0xff]
  %v1547 = vld [vmem:[%s11 + $0x8] sm:$0xff]
  %v1548 = vld [vmem:[%s11 + $0x10] sm:$0xff]
  %v1549 = vld [vmem:[%s11 + $0x18] sm:$0xff]
  %v1550 = vld [vmem:[%s12] sm:$0x1]
  %v1552 = vlaneseq
  %v1553 = vshrl.u32 %v1552, 7
  %v1554 = vsub.s32 0, %v1553
  %v1555 = vrot.slane %v1550, %v1554
  %v1558 = vsel %vm1452, %v1545, 0
  %1560 = vmatprep.subr.mxu0 0.0
  %1561 = vmatpush1.msra.mxu0 %v1546
  %1562 = vmatprep.subr.mxu0 0.0
  %1563 = vmatpush1.msra.mxu0 %v1547
  %1564 = vmatprep.subr.mxu0 0.0
  %1565 = vmatpush1.msra.mxu0 %v1548
  %1566 = vmatprep.subr.mxu0 0.0
  %1567 = vmatpush1.msra.mxu0 %v1549
  %1568 = vmatprep.subr.mxu0 0.0
  %1569 = vmatpush1.msra.mxu0 0.0
  %1570 = vmatprep.subr.mxu0 0.0
  %1571 = vmatpush1.msra.mxu0 0.0
  %1572 = vmatprep.subr.mxu0 0.0
  %1573 = vmatpush1.msra.mxu0 0.0
  %1574 = vmatprep.subr.mxu0 0.0
  %1575 = vmatpush1.msra.mxu0 0.0
  %1576 = vmatprep.subr.mxu0 0.0
  %1577 = vmatpush1.msra.mxu0 0.0
  %1578 = vmatprep.subr.mxu0 0.0
  %1579 = vmatpush1.msra.mxu0 0.0
  %1580 = vmatprep.subr.mxu0 0.0
  %1581 = vmatpush1.msra.mxu0 0.0
  %1582 = vmatprep.subr.mxu0 0.0
  %1583 = vmatpush1.msra.mxu0 0.0
  %1584 = vmatprep.subr.mxu0 0.0
  %1585 = vmatpush1.msra.mxu0 0.0
  %1586 = vmatprep.subr.mxu0 0.0
  %1587 = vmatpush1.msra.mxu0 0.0
  %1588 = vmatprep.subr.mxu0 0.0
  %1589 = vmatpush1.msra.mxu0 0.0
  %1590 = vmatprep.subr.mxu0 0.0
  %1591 = vmatpush1.msra.mxu0 0.0
  %1592 = vmatprep.subr.mxu0 0.0
  %1593 = vmatpush1.msra.mxu0 0.0
  %1594 = vmatprep.subr.mxu0 0.0
  %1595 = vmatpush1.msra.mxu0 0.0
  %1596 = vmatprep.subr.mxu0 0.0
  %1597 = vmatpush1.msra.mxu0 0.0
  %1598 = vmatprep.subr.mxu0 0.0
  %1599 = vmatpush1.msra.mxu0 0.0
  %1600 = vmatprep.subr.mxu0 0.0
  %1601 = vmatpush1.msra.mxu0 0.0
  %1602 = vmatprep.subr.mxu0 0.0
  %1603 = vmatpush1.msra.mxu0 0.0
  %1604 = vmatprep.subr.mxu0 0.0
  %1605 = vmatpush1.msra.mxu0 0.0
  %1606 = vmatprep.subr.mxu0 0.0
  %1607 = vmatpush1.msra.mxu0 0.0
  %1608 = vmatprep.subr.mxu0 0.0
  %1609 = vmatpush1.msra.mxu0 0.0
  %1610 = vmatprep.subr.mxu0 0.0
  %1611 = vmatpush1.msra.mxu0 0.0
  %1612 = vmatprep.subr.mxu0 0.0
  %1613 = vmatpush1.msra.mxu0 0.0
  %1614 = vmatprep.subr.mxu0 0.0
  %1615 = vmatpush1.msra.mxu0 0.0
  %1616 = vmatprep.subr.mxu0 0.0
  %1617 = vmatpush1.msra.mxu0 0.0
  %1618 = vmatprep.subr.mxu0 0.0
  %1619 = vmatpush1.msra.mxu0 0.0
  %1620 = vmatprep.subr.mxu0 0.0
  %1621 = vmatpush1.msra.mxu0 0.0
  %1622 = vmatprep.subr.mxu0 0.0
  %1623 = vmatpush1.msra.mxu0 0.0
  %1624 = vmatprep.mubr.f32.mxu0 0.0
  %1625 = vmatmul.mubr.f32.gmra.mrb[0].mxu0 %v1558
  %v1626 = vpop.f32.mrb[0].mxu0
  %v1627 = vadd.f32 %v1555, %v1626
  %v1628 = vpop.f32.mrb[0].mxu0
  %1629 = vdwg.mxu0
  %1630 = vst [vmem:[%s13] sm:$0x3f] %v1627
  // Predicated region
  $region54: #{m03_forward.1} parent=0 // pred_check
    _
  $region55: #{m03_forward.1} parent=0 // pred_check_branch
    %1632 = sbr.rel (0) target = $region57
  $region56: #{m03_forward.1} parent=0 // pred_region
    _
  $region57: #{m03_forward.1} parent=0 // pred_fallthru
    _
  // Predicated region
  $region58: #{m03_forward.1} parent=0 // pred_check
    _
  $region59: #{m03_forward.1} parent=0 // pred_check_branch
    %1634 = sbr.rel (0) target = $region61
  $region60: #{m03_forward.1} parent=0 // pred_region
    _
  $region61: #{m03_forward.1} parent=0 // pred_fallthru
    _
  // Predicated region
  $region62: #{m03_forward.1} parent=0 // pred_check
    _
  $region63: #{m03_forward.1} parent=0 // pred_check_branch
    %1636 = sbr.rel (0) target = $region65
  $region64: #{m03_forward.1} parent=0 // pred_region
    _
  $region65: #{m03_forward.1} parent=0 // pred_fallthru
    _
  // Predicated region
  $region66: #{m03_forward.1} parent=0 // pred_check
    _
  $region67: #{m03_forward.1} parent=0 // pred_check_branch
    %1638 = sbr.rel (0) target = $region69
  $region68: #{m03_forward.1} parent=0 // pred_region
    _
  $region69: #{m03_forward.1} parent=0 // pred_fallthru
    _

</llo_original>
